<compile_context>
chip_gen: v7x
topology: tpu7x:2x2x1
jax: 0.10.0
libtpu: 0.0.40
codegen_flags: <defaults>
</compile_context>

<pallas_src>
import functools

import jax
import jax.numpy as jnp
from jax import lax
from jax.experimental import pallas as pl
from jax.experimental.pallas import tpu as pltpu


def _r8(n):
    """Round up to a multiple of 8 (f32 sublane tile) — shared by packer & kernel."""
    return -(-n // 8) * 8


# ---------------------------------------------------------------------------
# Fused kernel: all RNN layers (wavefront) + BatchNorm1d + Linear head,
# one pallas_call, no grid, everything resident in VMEM / vregs.
# ---------------------------------------------------------------------------
def fused_rnn_kernel(num_layers, seq_len, batch, in_size, hidden, out_size,
                     x_ref, w_ref, vec_ref, fcw_ref, o_ref):
    L, T, B, D, H, O = num_layers, seq_len, batch, in_size, hidden, out_size

    # --- Static unpacking of the packed weight slab (sub-blocks are 8-row aligned).
    off = 0
    w_ih0 = w_ref[off:off + D, :]            # (D, H)  layer-0 input projection
    off += _r8(D)
    w_hh0 = w_ref[off:off + H, :]            # (H, H)  layer-0 hidden projection
    off += _r8(H)
    w_cat = []                               # layers >= 1: (2H, H) = [W_ih^T ; W_hh^T]
    for _ in range(1, L):
        w_cat.append(w_ref[off:off + 2 * H, :])
        off += _r8(2 * H)

    # --- Packed small vectors: rows 0..L-1 fused biases, then gamma, beta, fc_b.
    vec = vec_ref[...]                                       # (L+3, max(H,O))
    b_rows = [vec[l:l + 1, :H] for l in range(L)]            # (1, H) each
    # Pre-broadcast per-step biases once (outside the loop; JAX doesn't CSE bcasts).
    bias_step = [jnp.broadcast_to(b_rows[l], (B, H)) for l in range(1, L)]
    gamma = vec[L:L + 1, :H]
    beta = vec[L + 1:L + 2, :H]
    fc_b = vec[L + 2:L + 3, :O]

    # --- Layer-0 input projection hoisted off the serial chain: one tall matmul
    # over all timesteps, with the fused bias folded in.
    x = x_ref[...].astype(jnp.float32)                       # (T*B, D), time-major
    pre0 = jnp.dot(x, w_ih0, preferred_element_type=jnp.float32) + b_rows[0]

    # --- Wavefront recurrence: T + L - 1 global steps; within a step every active
    # layer depends only on the PREVIOUS step's values, so their matmuls overlap.
    h = [jnp.zeros((B, H), jnp.float32) for _ in range(L)]   # h0 = zeros (as in torch)
    for s in range(T + L - 1):                               # static unroll; T, L small
        prev = list(h)
        for l in range(L):
            t = s - l
            if 0 <= t < T:
                if l == 0:
                    sl = slice(t * B, (t + 1) * B)           # static, sublane-aligned
                    h[0] = jnp.tanh(
                        pre0[sl]
                        + jnp.dot(prev[0], w_hh0,
                                  preferred_element_type=jnp.float32))
                else:
                    # Single MXU push per step: concat input+hidden along lanes.
                    xin = jnp.concatenate([prev[l - 1], prev[l]], axis=1)  # (B, 2H)
                    h[l] = jnp.tanh(
                        bias_step[l - 1]
                        + jnp.dot(xin, w_cat[l - 1],
                                  preferred_element_type=jnp.float32))

    # --- BatchNorm1d (batch statistics) + Linear head on the last hidden state.
    hl = h[L - 1]                                            # (B, H) == out[:, -1, :]
    mean = jnp.mean(hl, axis=0, keepdims=True)
    var = jnp.mean((hl - mean) ** 2, axis=0, keepdims=True)  # biased, like torch BN train
    xn = (hl - mean) * lax.rsqrt(var + 1e-5)
    y = xn * gamma + beta
    o_ref[...] = (jnp.dot(y, fcw_ref[...], preferred_element_type=jnp.float32)
                  + fc_b).astype(o_ref.dtype)


# ---------------------------------------------------------------------------
# Parameter init (matches torch defaults) and ONE-TIME packing (off the jit path)
# ---------------------------------------------------------------------------
def init_params(key, in_size, hidden, num_layers, out_size):
    params = {"rnn": []}
    k = 1.0 / jnp.sqrt(hidden)
    for layer in range(num_layers):
        d_in = in_size if layer == 0 else hidden
        key, k1, k2, k3, k4 = jax.random.split(key, 5)
        params["rnn"].append({
            "w_ih": jax.random.uniform(k1, (hidden, d_in), jnp.float32, -k, k),
            "w_hh": jax.random.uniform(k2, (hidden, hidden), jnp.float32, -k, k),
            "b_ih": jax.random.uniform(k3, (hidden,), jnp.float32, -k, k),
            "b_hh": jax.random.uniform(k4, (hidden,), jnp.float32, -k, k),
        })
    key, k5, k6 = jax.random.split(key, 3)
    params["bn_gamma"] = jnp.ones((hidden,), jnp.float32)    # torch BN default init
    params["bn_beta"] = jnp.zeros((hidden,), jnp.float32)
    kf = 1.0 / jnp.sqrt(hidden)
    params["fc_w"] = jax.random.uniform(k5, (out_size, hidden), jnp.float32, -kf, kf)
    params["fc_b"] = jax.random.uniform(k6, (out_size,), jnp.float32, -kf, kf)
    return params


def pack_params(params):
    """One-time weight prep: transposes, bias fusion, operand packing (4 operands)."""
    L = len(params["rnn"])
    H = params["rnn"][0]["w_hh"].shape[0]
    D = params["rnn"][0]["w_ih"].shape[1]
    O = params["fc_w"].shape[0]

    def pad_rows(a, rows):
        return jnp.pad(a, ((0, rows - a.shape[0]), (0, 0)))

    # Weight slab: [W_ih0^T | W_hh0^T | (W_ih1^T;W_hh1^T) | ...], 8-row-aligned blocks.
    blocks = [pad_rows(params["rnn"][0]["w_ih"].T, _r8(D)),
              pad_rows(params["rnn"][0]["w_hh"].T, _r8(H))]
    for l in range(1, L):
        cat = jnp.concatenate([params["rnn"][l]["w_ih"].T,
                               params["rnn"][l]["w_hh"].T], axis=0)   # (2H, H)
        blocks.append(pad_rows(cat, _r8(2 * H)))
    w_pack = jnp.concatenate(blocks, axis=0)

    # Small-vector pack: per-layer fused bias rows, gamma, beta, fc bias.
    P = max(H, O)
    pad_v = lambda v: jnp.pad(v, (0, P - v.shape[0]))
    rows = [pad_v(params["rnn"][l]["b_ih"] + params["rnn"][l]["b_hh"]) for l in range(L)]
    rows += [pad_v(params["bn_gamma"]), pad_v(params["bn_beta"]), pad_v(params["fc_b"])]
    vec_pack = jnp.stack(rows, axis=0)                        # (L+3, P)

    return {"w_pack": w_pack, "vec_pack": vec_pack, "fc_w_t": params["fc_w"].T}


# ---------------------------------------------------------------------------
# Jitted forward: only the per-call data reshape + the single pallas_call.
# ---------------------------------------------------------------------------
@functools.partial(jax.jit, static_argnums=(2, 3))
def simple_rnn_forward(packed, x, seq_size, in_size):
    x = x.reshape(-1, seq_size, in_size)                     # x.view(-1, seq, in)
    B = x.shape[0]
    T, D = seq_size, in_size
    H, O = packed["fc_w_t"].shape
    L = packed["vec_pack"].shape[0] - 3

    # Time-major flatten: (B, T, D) -> (T, B, D) -> (T*B, D); per-timestep block is
    # then a static, sublane-aligned (B, :) slice inside the kernel.
    x_flat = jnp.transpose(x, (1, 0, 2)).reshape(T * B, D)

    kernel = functools.partial(fused_rnn_kernel, L, T, B, D, H, O)
    return pl.pallas_call(
        kernel,
        out_shape=jax.ShapeDtypeStruct((B, O), x.dtype),
        in_specs=[pl.BlockSpec(memory_space=pltpu.MemorySpace.VMEM)] * 4,
        out_specs=pl.BlockSpec(memory_space=pltpu.MemorySpace.VMEM),
    )(x_flat, packed["w_pack"], packed["vec_pack"], packed["fc_w_t"])


if __name__ == "__main__":
    B, SEQ, IN, HIDDEN, LAYERS, OUT = 8, 8, 16, 32, 2, 10

    key = jax.random.PRNGKey(0)
    key, kx, kp = jax.random.split(key, 3)
    x = jax.random.normal(kx, (B, SEQ, IN), jnp.float32)
    params = init_params(kp, IN, HIDDEN, LAYERS, OUT)
    packed = pack_params(params)                              # done once, off the hot path

    out = simple_rnn_forward(packed, x, SEQ, IN)
    out = jax.block_until_ready(out)
    assert out.shape == (B, OUT) and out.dtype == jnp.float32
    assert bool(jnp.all(jnp.isfinite(out)))
    print("KERNEL_OK")
</pallas_src>

<mosaic_0001>
module attributes {stable_mosaic.version = 11 : i64} {
  func.func @fused_rnn_kernel(%arg0: memref<64x16xf32, #tpu.memory_space<vmem>>, %arg1: memref<112x32xf32, #tpu.memory_space<vmem>>, %arg2: memref<5x32xf32, #tpu.memory_space<vmem>>, %arg3: memref<32x10xf32, #tpu.memory_space<vmem>>, %arg4: memref<8x10xf32, #tpu.memory_space<vmem>>) attributes {dimension_semantics = [], scalar_prefetch = 0 : i64, scratch_operands = 0 : i64, tpu.core_type = #tpu.core_type<tc>} {
    %c0 = arith.constant 0 : index
    %c0_0 = arith.constant 0 : index
    %0 = vector.load %arg1[%c0, %c0_0] : memref<112x32xf32, #tpu.memory_space<vmem>>, vector<16x32xf32>
    %c16 = arith.constant 16 : index
    %c0_1 = arith.constant 0 : index
    %1 = vector.load %arg1[%c16, %c0_1] : memref<112x32xf32, #tpu.memory_space<vmem>>, vector<32x32xf32>
    %c48 = arith.constant 48 : index
    %c0_2 = arith.constant 0 : index
    %2 = vector.load %arg1[%c48, %c0_2] : memref<112x32xf32, #tpu.memory_space<vmem>>, vector<64x32xf32>
    %c0_3 = arith.constant 0 : index
    %c0_4 = arith.constant 0 : index
    %3 = vector.load %arg2[%c0_3, %c0_4] : memref<5x32xf32, #tpu.memory_space<vmem>>, vector<5x32xf32>
    %4 = vector.extract_strided_slice %3 {offsets = [0, 0], sizes = [1, 32], strides = [1, 1]} : vector<5x32xf32> to vector<1x32xf32>
    %5 = vector.extract_strided_slice %3 {offsets = [1, 0], sizes = [1, 32], strides = [1, 1]} : vector<5x32xf32> to vector<1x32xf32>
    %6 = vector.shape_cast %5 : vector<1x32xf32> to vector<1x32xf32>
    %7 = vector.broadcast %6 : vector<1x32xf32> to vector<8x32xf32>
    %8 = vector.extract_strided_slice %3 {offsets = [2, 0], sizes = [1, 32], strides = [1, 1]} : vector<5x32xf32> to vector<1x32xf32>
    %9 = vector.extract_strided_slice %3 {offsets = [3, 0], sizes = [1, 32], strides = [1, 1]} : vector<5x32xf32> to vector<1x32xf32>
    %10 = vector.extract_strided_slice %3 {offsets = [4, 0], sizes = [1, 10], strides = [1, 1]} : vector<5x32xf32> to vector<1x10xf32>
    %c0_5 = arith.constant 0 : index
    %c0_6 = arith.constant 0 : index
    %11 = vector.load %arg0[%c0_5, %c0_6] : memref<64x16xf32, #tpu.memory_space<vmem>>, vector<64x16xf32>
    %cst = arith.constant dense<0.000000e+00> : vector<64x32xf32>
    %12 = tpu.matmul %11, %0, %cst {dimension_numbers = #tpu.dot_dimension_numbers<[1], [0], [0], [1], [0, 0, 1, 1], [], []>} : vector<64x16xf32>, vector<16x32xf32>, vector<64x32xf32> -> vector<64x32xf32>
    %13 = vector.broadcast %4 : vector<1x32xf32> to vector<64x32xf32>
    %14 = arith.addf %12, %13 : vector<64x32xf32>
    %cst_7 = arith.constant 0.000000e+00 : f32
    %15 = vector.broadcast %cst_7 : f32 to vector<8x32xf32>
    %cst_8 = arith.constant 0.000000e+00 : f32
    %16 = vector.broadcast %cst_8 : f32 to vector<8x32xf32>
    %17 = vector.extract_strided_slice %14 {offsets = [0, 0], sizes = [8, 32], strides = [1, 1]} : vector<64x32xf32> to vector<8x32xf32>
    %cst_9 = arith.constant dense<0.000000e+00> : vector<8x32xf32>
    %18 = tpu.matmul %15, %1, %cst_9 {dimension_numbers = #tpu.dot_dimension_numbers<[1], [0], [0], [1], [0, 0, 1, 1], [], []>} : vector<8x32xf32>, vector<32x32xf32>, vector<8x32xf32> -> vector<8x32xf32>
    %19 = arith.addf %17, %18 : vector<8x32xf32>
    %20 = math.tanh %19 : vector<8x32xf32>
    %21 = vector.extract_strided_slice %14 {offsets = [8, 0], sizes = [8, 32], strides = [1, 1]} : vector<64x32xf32> to vector<8x32xf32>
    %cst_10 = arith.constant dense<0.000000e+00> : vector<8x32xf32>
    %22 = tpu.matmul %20, %1, %cst_10 {dimension_numbers = #tpu.dot_dimension_numbers<[1], [0], [0], [1], [0, 0, 1, 1], [], []>} : vector<8x32xf32>, vector<32x32xf32>, vector<8x32xf32> -> vector<8x32xf32>
    %23 = arith.addf %21, %22 : vector<8x32xf32>
    %24 = math.tanh %23 : vector<8x32xf32>
    %25 = tpu.concatenate %20, %16 in 1 : vector<8x32xf32>, vector<8x32xf32> -> vector<8x64xf32>
    %cst_11 = arith.constant dense<0.000000e+00> : vector<8x32xf32>
    %26 = tpu.matmul %25, %2, %cst_11 {dimension_numbers = #tpu.dot_dimension_numbers<[1], [0], [0], [1], [0, 0, 1, 1], [], []>} : vector<8x64xf32>, vector<64x32xf32>, vector<8x32xf32> -> vector<8x32xf32>
    %27 = arith.addf %7, %26 : vector<8x32xf32>
    %28 = math.tanh %27 : vector<8x32xf32>
    %29 = vector.extract_strided_slice %14 {offsets = [16, 0], sizes = [8, 32], strides = [1, 1]} : vector<64x32xf32> to vector<8x32xf32>
    %cst_12 = arith.constant dense<0.000000e+00> : vector<8x32xf32>
    %30 = tpu.matmul %24, %1, %cst_12 {dimension_numbers = #tpu.dot_dimension_numbers<[1], [0], [0], [1], [0, 0, 1, 1], [], []>} : vector<8x32xf32>, vector<32x32xf32>, vector<8x32xf32> -> vector<8x32xf32>
    %31 = arith.addf %29, %30 : vector<8x32xf32>
    %32 = math.tanh %31 : vector<8x32xf32>
    %33 = tpu.concatenate %24, %28 in 1 : vector<8x32xf32>, vector<8x32xf32> -> vector<8x64xf32>
    %cst_13 = arith.constant dense<0.000000e+00> : vector<8x32xf32>
    %34 = tpu.matmul %33, %2, %cst_13 {dimension_numbers = #tpu.dot_dimension_numbers<[1], [0], [0], [1], [0, 0, 1, 1], [], []>} : vector<8x64xf32>, vector<64x32xf32>, vector<8x32xf32> -> vector<8x32xf32>
    %35 = arith.addf %7, %34 : vector<8x32xf32>
    %36 = math.tanh %35 : vector<8x32xf32>
    %37 = vector.extract_strided_slice %14 {offsets = [24, 0], sizes = [8, 32], strides = [1, 1]} : vector<64x32xf32> to vector<8x32xf32>
    %cst_14 = arith.constant dense<0.000000e+00> : vector<8x32xf32>
    %38 = tpu.matmul %32, %1, %cst_14 {dimension_numbers = #tpu.dot_dimension_numbers<[1], [0], [0], [1], [0, 0, 1, 1], [], []>} : vector<8x32xf32>, vector<32x32xf32>, vector<8x32xf32> -> vector<8x32xf32>
    %39 = arith.addf %37, %38 : vector<8x32xf32>
    %40 = math.tanh %39 : vector<8x32xf32>
    %41 = tpu.concatenate %32, %36 in 1 : vector<8x32xf32>, vector<8x32xf32> -> vector<8x64xf32>
    %cst_15 = arith.constant dense<0.000000e+00> : vector<8x32xf32>
    %42 = tpu.matmul %41, %2, %cst_15 {dimension_numbers = #tpu.dot_dimension_numbers<[1], [0], [0], [1], [0, 0, 1, 1], [], []>} : vector<8x64xf32>, vector<64x32xf32>, vector<8x32xf32> -> vector<8x32xf32>
    %43 = arith.addf %7, %42 : vector<8x32xf32>
    %44 = math.tanh %43 : vector<8x32xf32>
    %45 = vector.extract_strided_slice %14 {offsets = [32, 0], sizes = [8, 32], strides = [1, 1]} : vector<64x32xf32> to vector<8x32xf32>
    %cst_16 = arith.constant dense<0.000000e+00> : vector<8x32xf32>
    %46 = tpu.matmul %40, %1, %cst_16 {dimension_numbers = #tpu.dot_dimension_numbers<[1], [0], [0], [1], [0, 0, 1, 1], [], []>} : vector<8x32xf32>, vector<32x32xf32>, vector<8x32xf32> -> vector<8x32xf32>
    %47 = arith.addf %45, %46 : vector<8x32xf32>
    %48 = math.tanh %47 : vector<8x32xf32>
    %49 = tpu.concatenate %40, %44 in 1 : vector<8x32xf32>, vector<8x32xf32> -> vector<8x64xf32>
    %cst_17 = arith.constant dense<0.000000e+00> : vector<8x32xf32>
    %50 = tpu.matmul %49, %2, %cst_17 {dimension_numbers = #tpu.dot_dimension_numbers<[1], [0], [0], [1], [0, 0, 1, 1], [], []>} : vector<8x64xf32>, vector<64x32xf32>, vector<8x32xf32> -> vector<8x32xf32>
    %51 = arith.addf %7, %50 : vector<8x32xf32>
    %52 = math.tanh %51 : vector<8x32xf32>
    %53 = vector.extract_strided_slice %14 {offsets = [40, 0], sizes = [8, 32], strides = [1, 1]} : vector<64x32xf32> to vector<8x32xf32>
    %cst_18 = arith.constant dense<0.000000e+00> : vector<8x32xf32>
    %54 = tpu.matmul %48, %1, %cst_18 {dimension_numbers = #tpu.dot_dimension_numbers<[1], [0], [0], [1], [0, 0, 1, 1], [], []>} : vector<8x32xf32>, vector<32x32xf32>, vector<8x32xf32> -> vector<8x32xf32>
    %55 = arith.addf %53, %54 : vector<8x32xf32>
    %56 = math.tanh %55 : vector<8x32xf32>
    %57 = tpu.concatenate %48, %52 in 1 : vector<8x32xf32>, vector<8x32xf32> -> vector<8x64xf32>
    %cst_19 = arith.constant dense<0.000000e+00> : vector<8x32xf32>
    %58 = tpu.matmul %57, %2, %cst_19 {dimension_numbers = #tpu.dot_dimension_numbers<[1], [0], [0], [1], [0, 0, 1, 1], [], []>} : vector<8x64xf32>, vector<64x32xf32>, vector<8x32xf32> -> vector<8x32xf32>
    %59 = arith.addf %7, %58 : vector<8x32xf32>
    %60 = math.tanh %59 : vector<8x32xf32>
    %61 = vector.extract_strided_slice %14 {offsets = [48, 0], sizes = [8, 32], strides = [1, 1]} : vector<64x32xf32> to vector<8x32xf32>
    %cst_20 = arith.constant dense<0.000000e+00> : vector<8x32xf32>
    %62 = tpu.matmul %56, %1, %cst_20 {dimension_numbers = #tpu.dot_dimension_numbers<[1], [0], [0], [1], [0, 0, 1, 1], [], []>} : vector<8x32xf32>, vector<32x32xf32>, vector<8x32xf32> -> vector<8x32xf32>
    %63 = arith.addf %61, %62 : vector<8x32xf32>
    %64 = math.tanh %63 : vector<8x32xf32>
    %65 = tpu.concatenate %56, %60 in 1 : vector<8x32xf32>, vector<8x32xf32> -> vector<8x64xf32>
    %cst_21 = arith.constant dense<0.000000e+00> : vector<8x32xf32>
    %66 = tpu.matmul %65, %2, %cst_21 {dimension_numbers = #tpu.dot_dimension_numbers<[1], [0], [0], [1], [0, 0, 1, 1], [], []>} : vector<8x64xf32>, vector<64x32xf32>, vector<8x32xf32> -> vector<8x32xf32>
    %67 = arith.addf %7, %66 : vector<8x32xf32>
    %68 = math.tanh %67 : vector<8x32xf32>
    %69 = vector.extract_strided_slice %14 {offsets = [56, 0], sizes = [8, 32], strides = [1, 1]} : vector<64x32xf32> to vector<8x32xf32>
    %cst_22 = arith.constant dense<0.000000e+00> : vector<8x32xf32>
    %70 = tpu.matmul %64, %1, %cst_22 {dimension_numbers = #tpu.dot_dimension_numbers<[1], [0], [0], [1], [0, 0, 1, 1], [], []>} : vector<8x32xf32>, vector<32x32xf32>, vector<8x32xf32> -> vector<8x32xf32>
    %71 = arith.addf %69, %70 : vector<8x32xf32>
    %72 = math.tanh %71 : vector<8x32xf32>
    %73 = tpu.concatenate %64, %68 in 1 : vector<8x32xf32>, vector<8x32xf32> -> vector<8x64xf32>
    %cst_23 = arith.constant dense<0.000000e+00> : vector<8x32xf32>
    %74 = tpu.matmul %73, %2, %cst_23 {dimension_numbers = #tpu.dot_dimension_numbers<[1], [0], [0], [1], [0, 0, 1, 1], [], []>} : vector<8x64xf32>, vector<64x32xf32>, vector<8x32xf32> -> vector<8x32xf32>
    %75 = arith.addf %7, %74 : vector<8x32xf32>
    %76 = math.tanh %75 : vector<8x32xf32>
    %77 = tpu.concatenate %72, %76 in 1 : vector<8x32xf32>, vector<8x32xf32> -> vector<8x64xf32>
    %cst_24 = arith.constant dense<0.000000e+00> : vector<8x32xf32>
    %78 = tpu.matmul %77, %2, %cst_24 {dimension_numbers = #tpu.dot_dimension_numbers<[1], [0], [0], [1], [0, 0, 1, 1], [], []>} : vector<8x64xf32>, vector<64x32xf32>, vector<8x32xf32> -> vector<8x32xf32>
    %79 = arith.addf %7, %78 : vector<8x32xf32>
    %80 = math.tanh %79 : vector<8x32xf32>
    %cst_25 = arith.constant dense<0.000000e+00> : vector<32xf32>
    %81 = vector.multi_reduction <add>, %80, %cst_25 [0] : vector<8x32xf32> to vector<32xf32>
    %82 = vector.shape_cast %81 : vector<32xf32> to vector<1x32xf32>
    %cst_26 = arith.constant 8.000000e+00 : f32
    %83 = vector.broadcast %cst_26 : f32 to vector<1x32xf32>
    %84 = arith.divf %82, %83 : vector<1x32xf32>
    %85 = vector.broadcast %84 : vector<1x32xf32> to vector<8x32xf32>
    %86 = arith.subf %80, %85 : vector<8x32xf32>
    %87 = arith.mulf %86, %86 : vector<8x32xf32>
    %cst_27 = arith.constant dense<0.000000e+00> : vector<32xf32>
    %88 = vector.multi_reduction <add>, %87, %cst_27 [0] : vector<8x32xf32> to vector<32xf32>
    %89 = vector.shape_cast %88 : vector<32xf32> to vector<1x32xf32>
    %cst_28 = arith.constant 8.000000e+00 : f32
    %90 = vector.broadcast %cst_28 : f32 to vector<1x32xf32>
    %91 = arith.divf %89, %90 : vector<1x32xf32>
    %92 = vector.broadcast %84 : vector<1x32xf32> to vector<8x32xf32>
    %93 = arith.subf %80, %92 : vector<8x32xf32>
    %cst_29 = arith.constant 9.99999974E-6 : f32
    %94 = vector.broadcast %cst_29 : f32 to vector<1x32xf32>
    %95 = arith.addf %91, %94 : vector<1x32xf32>
    %96 = math.rsqrt %95 : vector<1x32xf32>
    %97 = vector.broadcast %96 : vector<1x32xf32> to vector<8x32xf32>
    %98 = arith.mulf %93, %97 : vector<8x32xf32>
    %99 = vector.broadcast %8 : vector<1x32xf32> to vector<8x32xf32>
    %100 = arith.mulf %98, %99 : vector<8x32xf32>
    %101 = vector.broadcast %9 : vector<1x32xf32> to vector<8x32xf32>
    %102 = arith.addf %100, %101 : vector<8x32xf32>
    %c0_30 = arith.constant 0 : index
    %c0_31 = arith.constant 0 : index
    %103 = vector.load %arg3[%c0_30, %c0_31] : memref<32x10xf32, #tpu.memory_space<vmem>>, vector<32x10xf32>
    %cst_32 = arith.constant dense<0.000000e+00> : vector<8x10xf32>
    %104 = tpu.matmul %102, %103, %cst_32 {dimension_numbers = #tpu.dot_dimension_numbers<[1], [0], [0], [1], [0, 0, 1, 1], [], []>} : vector<8x32xf32>, vector<32x10xf32>, vector<8x10xf32> -> vector<8x10xf32>
    %105 = vector.broadcast %10 : vector<1x10xf32> to vector<8x10xf32>
    %106 = arith.addf %104, %105 : vector<8x10xf32>
    %c0_33 = arith.constant 0 : index
    %c0_34 = arith.constant 0 : index
    %107 = vector.load %arg4[%c0_33, %c0_34] : memref<8x10xf32, #tpu.memory_space<vmem>>, vector<8x10xf32>
    tpu.vector_store %arg4[%c0_33, %c0_34], %106 {strides = array<i32>} : memref<8x10xf32, #tpu.memory_space<vmem>>, vector<8x10xf32>,
    return
  }
}

</mosaic_0001>

<llo_original>
// kernel: simple_rnn_forward.1
$region0: #{simple_rnn_forward.1}
  #allocation0 [shape = 'u32[]', space=smem, size = 0x4, offset = 0x4, fixed_abs, tag = 'smem constant byte address 0x4 - core index']
  #allocation1 [shape = 'u32[144,128]{1,0:T(1,128)}', space=vmem, size = 0x12000, scoped, tag = 'internal scratch']
  %s0 = inlined_call_operand.vmem [shape: f32[64,16], index: 0, kind: input, shape index: {}]
  %s1 = inlined_call_operand.vmem [shape: f32[112,32], index: 1, kind: input, shape index: {}]
  %s2 = inlined_call_operand.vmem [shape: f32[5,32], index: 2, kind: input, shape index: {}]
  %s3 = inlined_call_operand.vmem [shape: f32[32,10], index: 3, kind: input, shape index: {}]
  %s4 = inlined_call_operand.hbm [shape: f32[8,10], index: 4, kind: output, shape index: {}]
  %s5 = sld [smem:[#allocation0]]
  $region26: #{simple_rnn_forward.1} parent=0
    _
  %s7 = ssub.s32 1, %s5
  %s8 = scalar_select 0, %s7, %s5
  $region1: #{simple_rnn_forward.1} parent=0
    #allocation2 [shape = 'u8[4096]{0}', space=vmem, size = 0x1000, scoped, tag = 'output window, operand 0, single buffered']
    #allocation3 [shape = 's32[1]{0}', space=sflag, size = 0x4, scoped, tag = 'scoped memory for simple_rnn_forward.1']
    %9 = vsyncpa [#allocation3], 0
    // Predicated region
    $region2: #{simple_rnn_forward.1} parent=1 // pred_check
      _
    $region3: #{simple_rnn_forward.1} parent=1 // pred_check_branch
      %11 = sbr.rel (0) target = $region5
    $region4: #{simple_rnn_forward.1} parent=1 // pred_region
      _
    $region5: #{simple_rnn_forward.1} parent=1 // pred_fallthru
      _
    // Predicated region
    $region6: #{simple_rnn_forward.1} parent=1 // pred_check
      _
    $region7: #{simple_rnn_forward.1} parent=1 // pred_check_branch
      %13 = sbr.rel (0) target = $region9
    $region8: #{simple_rnn_forward.1} parent=1 // pred_region
      _
    $region9: #{simple_rnn_forward.1} parent=1 // pred_fallthru
      _
    // Predicated region
    $region10: #{simple_rnn_forward.1} parent=1 // pred_check
      _
    $region11: #{simple_rnn_forward.1} parent=1 // pred_check_branch
      %15 = sbr.rel (0) target = $region13
    $region12: #{simple_rnn_forward.1} parent=1 // pred_region
      _
    $region13: #{simple_rnn_forward.1} parent=1 // pred_fallthru
      _
    // Predicated region
    $region14: #{simple_rnn_forward.1} parent=1 // pred_check
      _
    $region15: #{simple_rnn_forward.1} parent=1 // pred_check_branch
      %17 = sbr.rel (0) target = $region17
    $region16: #{simple_rnn_forward.1} parent=1 // pred_region
      _
    $region17: #{simple_rnn_forward.1} parent=1 // pred_fallthru
      _
    %v18 = vld [vmem:[%s1] sm:$0xff]
    %v19 = vld [vmem:[%s1 + $0x8] sm:$0xff]
    %v20 = vld [vmem:[%s1 + $0x10] sm:$0xff]
    %v21 = vld [vmem:[%s1 + $0x18] sm:$0xff]
    %v22 = vld [vmem:[%s1 + $0x20] sm:$0xff]
    %v23 = vld [vmem:[%s1 + $0x28] sm:$0xff]
    %v24 = vld [vmem:[%s1 + $0x30] sm:$0xff]
    %v25 = vld [vmem:[%s1 + $0x38] sm:$0xff]
    %v26 = vld [vmem:[%s1 + $0x40] sm:$0xff]
    %v27 = vld [vmem:[%s1 + $0x48] sm:$0xff]
    %v28 = vld [vmem:[%s1 + $0x50] sm:$0xff]
    %v29 = vld [vmem:[%s1 + $0x58] sm:$0xff]
    %v30 = vld [vmem:[%s1 + $0x60] sm:$0xff]
    %v31 = vld [vmem:[%s1 + $0x68] sm:$0xff]
    %v32 = vld [vmem:[%s2] sm:$0x1f]
    %v33 = vlaneseq
    %v34 = vshrl.u32 %v33, 7
    %v35 = vsub.s32 1, %v34
    %v36 = vrot.slane %v32, %v35
    %v37 = vld [vmem:[%s0] sm:$0xff]
    %v38 = vld [vmem:[%s0 + $0x8] sm:$0xff]
    %v39 = vld [vmem:[%s0 + $0x10] sm:$0xff]
    %v40 = vld [vmem:[%s0 + $0x18] sm:$0xff]
    %v41 = vld [vmem:[%s0 + $0x20] sm:$0xff]
    %v42 = vld [vmem:[%s0 + $0x28] sm:$0xff]
    %v43 = vld [vmem:[%s0 + $0x30] sm:$0xff]
    %v44 = vld [vmem:[%s0 + $0x38] sm:$0xff]
    %v45 = vlaneseq
    %v46 = vshrl.u32 %v45, 7
    %v47 = vsub.s32 0, %v46
    %v48 = vrot.slane %v32, %v47
    %vm49 = vcmask 130048
    %v51 = vsel %vm49, %v37, 0
    %v54 = vsel %vm49, %v38, 0
    %v57 = vsel %vm49, %v39, 0
    %v60 = vsel %vm49, %v40, 0
    %v63 = vsel %vm49, %v41, 0
    %v66 = vsel %vm49, %v42, 0
    %v69 = vsel %vm49, %v43, 0
    %v72 = vsel %vm49, %v44, 0
    %74 = vmatprep.subr.mxu0 0.0
    %75 = vmatpush1.msra.mxu0 %v18
    %76 = vmatprep.subr.mxu0 0.0
    %77 = vmatpush1.msra.mxu0 %v19
    %78 = vmatprep.subr.mxu0 0.0
    %79 = vmatpush1.msra.mxu0 0.0
    %80 = vmatprep.subr.mxu0 0.0
    %81 = vmatpush1.msra.mxu0 0.0
    %82 = vmatprep.subr.mxu0 0.0
    %83 = vmatpush1.msra.mxu0 0.0
    %84 = vmatprep.subr.mxu0 0.0
    %85 = vmatpush1.msra.mxu0 0.0
    %86 = vmatprep.subr.mxu0 0.0
    %87 = vmatpush1.msra.mxu0 0.0
    %88 = vmatprep.subr.mxu0 0.0
    %89 = vmatpush1.msra.mxu0 0.0
    %90 = vmatprep.subr.mxu0 0.0
    %91 = vmatpush1.msra.mxu0 0.0
    %92 = vmatprep.subr.mxu0 0.0
    %93 = vmatpush1.msra.mxu0 0.0
    %94 = vmatprep.subr.mxu0 0.0
    %95 = vmatpush1.msra.mxu0 0.0
    %96 = vmatprep.subr.mxu0 0.0
    %97 = vmatpush1.msra.mxu0 0.0
    %98 = vmatprep.subr.mxu0 0.0
    %99 = vmatpush1.msra.mxu0 0.0
    %100 = vmatprep.subr.mxu0 0.0
    %101 = vmatpush1.msra.mxu0 0.0
    %102 = vmatprep.subr.mxu0 0.0
    %103 = vmatpush1.msra.mxu0 0.0
    %104 = vmatprep.subr.mxu0 0.0
    %105 = vmatpush1.msra.mxu0 0.0
    %106 = vmatprep.subr.mxu0 0.0
    %107 = vmatpush1.msra.mxu0 0.0
    %108 = vmatprep.subr.mxu0 0.0
    %109 = vmatpush1.msra.mxu0 0.0
    %110 = vmatprep.subr.mxu0 0.0
    %111 = vmatpush1.msra.mxu0 0.0
    %112 = vmatprep.subr.mxu0 0.0
    %113 = vmatpush1.msra.mxu0 0.0
    %114 = vmatprep.subr.mxu0 0.0
    %115 = vmatpush1.msra.mxu0 0.0
    %116 = vmatprep.subr.mxu0 0.0
    %117 = vmatpush1.msra.mxu0 0.0
    %118 = vmatprep.subr.mxu0 0.0
    %119 = vmatpush1.msra.mxu0 0.0
    %120 = vmatprep.subr.mxu0 0.0
    %121 = vmatpush1.msra.mxu0 0.0
    %122 = vmatprep.subr.mxu0 0.0
    %123 = vmatpush1.msra.mxu0 0.0
    %124 = vmatprep.subr.mxu0 0.0
    %125 = vmatpush1.msra.mxu0 0.0
    %126 = vmatprep.subr.mxu0 0.0
    %127 = vmatpush1.msra.mxu0 0.0
    %128 = vmatprep.subr.mxu0 0.0
    %129 = vmatpush1.msra.mxu0 0.0
    %130 = vmatprep.subr.mxu0 0.0
    %131 = vmatpush1.msra.mxu0 0.0
    %132 = vmatprep.subr.mxu0 0.0
    %133 = vmatpush1.msra.mxu0 0.0
    %134 = vmatprep.subr.mxu0 0.0
    %135 = vmatpush1.msra.mxu0 0.0
    %136 = vmatprep.subr.mxu0 0.0
    %137 = vmatpush1.msra.mxu0 0.0
    %138 = vmatprep.mubr.f32.mxu0 0.0
    %139 = vmatmul.mubr.f32.gmra.mrb[0].mxu0 %v51
    %v140 = vpop.f32.mrb[0].mxu0
    %v141 = vadd.f32 %v48, %v140
    %v142 = vpop.f32.mrb[0].mxu0
    %143 = vmatprep.mubr.f32.mxu0 0.0
    %144 = vmatmul.mubr.f32.gmra.mrb[0].mxu0 %v54
    %v145 = vpop.f32.mrb[0].mxu0
    %v146 = vadd.f32 %v48, %v145
    %v147 = vpop.f32.mrb[0].mxu0
    %148 = vmatprep.mubr.f32.mxu0 0.0
    %149 = vmatmul.mubr.f32.gmra.mrb[0].mxu0 %v57
    %v150 = vpop.f32.mrb[0].mxu0
    %v151 = vadd.f32 %v48, %v150
    %v152 = vpop.f32.mrb[0].mxu0
    %153 = vmatprep.mubr.f32.mxu0 0.0
    %154 = vmatmul.mubr.f32.gmra.mrb[0].mxu0 %v60
    %v155 = vpop.f32.mrb[0].mxu0
    %v156 = vadd.f32 %v48, %v155
    %v157 = vpop.f32.mrb[0].mxu0
    %158 = vmatprep.mubr.f32.mxu0 0.0
    %159 = vmatmul.mubr.f32.gmra.mrb[0].mxu0 %v63
    %v160 = vpop.f32.mrb[0].mxu0
    %v161 = vadd.f32 %v48, %v160
    %v162 = vpop.f32.mrb[0].mxu0
    %163 = vmatprep.mubr.f32.mxu0 0.0
    %164 = vmatmul.mubr.f32.gmra.mrb[0].mxu0 %v66
    %v165 = vpop.f32.mrb[0].mxu0
    %v166 = vadd.f32 %v48, %v165
    %v167 = vpop.f32.mrb[0].mxu0
    %168 = vmatprep.mubr.f32.mxu0 0.0
    %169 = vmatmul.mubr.f32.gmra.mrb[0].mxu0 %v69
    %v170 = vpop.f32.mrb[0].mxu0
    %v171 = vadd.f32 %v48, %v170
    %v172 = vpop.f32.mrb[0].mxu0
    %173 = vmatprep.mubr.f32.mxu0 0.0
    %174 = vmatmul.mubr.f32.gmra.mrb[0].mxu0 %v72
    %v175 = vpop.f32.mrb[0].mxu0
    %v176 = vadd.f32 %v48, %v175
    %v177 = vpop.f32.mrb[0].mxu0
    %178 = vdwg.mxu0
    %vm179 = vcmask 261120
    %v181 = vsel %vm179, 0.0, 0
    %183 = vmatprep.subr.mxu0 0.0
    %184 = vmatpush1.msra.mxu0 %v20
    %185 = vmatprep.subr.mxu0 0.0
    %186 = vmatpush1.msra.mxu0 %v21
    %187 = vmatprep.subr.mxu0 0.0
    %188 = vmatpush1.msra.mxu0 %v22
    %189 = vmatprep.subr.mxu0 0.0
    %190 = vmatpush1.msra.mxu0 %v23
    %191 = vmatprep.subr.mxu0 0.0
    %192 = vmatpush1.msra.mxu0 0.0
    %193 = vmatprep.subr.mxu0 0.0
    %194 = vmatpush1.msra.mxu0 0.0
    %195 = vmatprep.subr.mxu0 0.0
    %196 = vmatpush1.msra.mxu0 0.0
    %197 = vmatprep.subr.mxu0 0.0
    %198 = vmatpush1.msra.mxu0 0.0
    %199 = vmatprep.subr.mxu0 0.0
    %200 = vmatpush1.msra.mxu0 0.0
    %201 = vmatprep.subr.mxu0 0.0
    %202 = vmatpush1.msra.mxu0 0.0
    %203 = vmatprep.subr.mxu0 0.0
    %204 = vmatpush1.msra.mxu0 0.0
    %205 = vmatprep.subr.mxu0 0.0
    %206 = vmatpush1.msra.mxu0 0.0
    %207 = vmatprep.subr.mxu0 0.0
    %208 = vmatpush1.msra.mxu0 0.0
    %209 = vmatprep.subr.mxu0 0.0
    %210 = vmatpush1.msra.mxu0 0.0
    %211 = vmatprep.subr.mxu0 0.0
    %212 = vmatpush1.msra.mxu0 0.0
    %213 = vmatprep.subr.mxu0 0.0
    %214 = vmatpush1.msra.mxu0 0.0
    %215 = vmatprep.subr.mxu0 0.0
    %216 = vmatpush1.msra.mxu0 0.0
    %217 = vmatprep.subr.mxu0 0.0
    %218 = vmatpush1.msra.mxu0 0.0
    %219 = vmatprep.subr.mxu0 0.0
    %220 = vmatpush1.msra.mxu0 0.0
    %221 = vmatprep.subr.mxu0 0.0
    %222 = vmatpush1.msra.mxu0 0.0
    %223 = vmatprep.subr.mxu0 0.0
    %224 = vmatpush1.msra.mxu0 0.0
    %225 = vmatprep.subr.mxu0 0.0
    %226 = vmatpush1.msra.mxu0 0.0
    %227 = vmatprep.subr.mxu0 0.0
    %228 = vmatpush1.msra.mxu0 0.0
    %229 = vmatprep.subr.mxu0 0.0
    %230 = vmatpush1.msra.mxu0 0.0
    %231 = vmatprep.subr.mxu0 0.0
    %232 = vmatpush1.msra.mxu0 0.0
    %233 = vmatprep.subr.mxu0 0.0
    %234 = vmatpush1.msra.mxu0 0.0
    %235 = vmatprep.subr.mxu0 0.0
    %236 = vmatpush1.msra.mxu0 0.0
    %237 = vmatprep.subr.mxu0 0.0
    %238 = vmatpush1.msra.mxu0 0.0
    %239 = vmatprep.subr.mxu0 0.0
    %240 = vmatpush1.msra.mxu0 0.0
    %241 = vmatprep.subr.mxu0 0.0
    %242 = vmatpush1.msra.mxu0 0.0
    %243 = vmatprep.subr.mxu0 0.0
    %244 = vmatpush1.msra.mxu0 0.0
    %245 = vmatprep.subr.mxu0 0.0
    %246 = vmatpush1.msra.mxu0 0.0
    %247 = vmatprep.mubr.f32.mxu0 0.0
    %248 = vmatmul.mubr.f32.gmra.mrb[0].mxu0 %v181
    %v249 = vpop.f32.mrb[0].mxu0
    %v250 = vadd.f32 0.0, %v249
    %v251 = vpop.f32.mrb[0].mxu0
    %252 = vdwg.mxu0
    %v253 = vadd.f32 %v141, %v250
    %v254 = vtanh.pop %v253
    %v256 = vsel %vm179, %v254, 0
    %258 = vmatprep.subr.mxu0 0.0
    %259 = vmatpush1.msra.mxu0 %v20
    %260 = vmatprep.subr.mxu0 0.0
    %261 = vmatpush1.msra.mxu0 %v21
    %262 = vmatprep.subr.mxu0 0.0
    %263 = vmatpush1.msra.mxu0 %v22
    %264 = vmatprep.subr.mxu0 0.0
    %265 = vmatpush1.msra.mxu0 %v23
    %266 = vmatprep.subr.mxu0 0.0
    %267 = vmatpush1.msra.mxu0 0.0
    %268 = vmatprep.subr.mxu0 0.0
    %269 = vmatpush1.msra.mxu0 0.0
    %270 = vmatprep.subr.mxu0 0.0
    %271 = vmatpush1.msra.mxu0 0.0
    %272 = vmatprep.subr.mxu0 0.0
    %273 = vmatpush1.msra.mxu0 0.0
    %274 = vmatprep.subr.mxu0 0.0
    %275 = vmatpush1.msra.mxu0 0.0
    %276 = vmatprep.subr.mxu0 0.0
    %277 = vmatpush1.msra.mxu0 0.0
    %278 = vmatprep.subr.mxu0 0.0
    %279 = vmatpush1.msra.mxu0 0.0
    %280 = vmatprep.subr.mxu0 0.0
    %281 = vmatpush1.msra.mxu0 0.0
    %282 = vmatprep.subr.mxu0 0.0
    %283 = vmatpush1.msra.mxu0 0.0
    %284 = vmatprep.subr.mxu0 0.0
    %285 = vmatpush1.msra.mxu0 0.0
    %286 = vmatprep.subr.mxu0 0.0
    %287 = vmatpush1.msra.mxu0 0.0
    %288 = vmatprep.subr.mxu0 0.0
    %289 = vmatpush1.msra.mxu0 0.0
    %290 = vmatprep.subr.mxu0 0.0
    %291 = vmatpush1.msra.mxu0 0.0
    %292 = vmatprep.subr.mxu0 0.0
    %293 = vmatpush1.msra.mxu0 0.0
    %294 = vmatprep.subr.mxu0 0.0
    %295 = vmatpush1.msra.mxu0 0.0
    %296 = vmatprep.subr.mxu0 0.0
    %297 = vmatpush1.msra.mxu0 0.0
    %298 = vmatprep.subr.mxu0 0.0
    %299 = vmatpush1.msra.mxu0 0.0
    %300 = vmatprep.subr.mxu0 0.0
    %301 = vmatpush1.msra.mxu0 0.0
    %302 = vmatprep.subr.mxu0 0.0
    %303 = vmatpush1.msra.mxu0 0.0
    %304 = vmatprep.subr.mxu0 0.0
    %305 = vmatpush1.msra.mxu0 0.0
    %306 = vmatprep.subr.mxu0 0.0
    %307 = vmatpush1.msra.mxu0 0.0
    %308 = vmatprep.subr.mxu0 0.0
    %309 = vmatpush1.msra.mxu0 0.0
    %310 = vmatprep.subr.mxu0 0.0
    %311 = vmatpush1.msra.mxu0 0.0
    %312 = vmatprep.subr.mxu0 0.0
    %313 = vmatpush1.msra.mxu0 0.0
    %314 = vmatprep.subr.mxu0 0.0
    %315 = vmatpush1.msra.mxu0 0.0
    %316 = vmatprep.subr.mxu0 0.0
    %317 = vmatpush1.msra.mxu0 0.0
    %318 = vmatprep.subr.mxu0 0.0
    %319 = vmatpush1.msra.mxu0 0.0
    %320 = vmatprep.subr.mxu0 0.0
    %321 = vmatpush1.msra.mxu0 0.0
    %322 = vmatprep.mubr.f32.mxu0 0.0
    %323 = vmatmul.mubr.f32.gmra.mrb[0].mxu0 %v256
    %v324 = vpop.f32.mrb[0].mxu0
    %v325 = vadd.f32 0.0, %v324
    %v326 = vpop.f32.mrb[0].mxu0
    %327 = vdwg.mxu0
    %v328 = vadd.f32 %v146, %v325
    %v329 = vtanh.pop %v328
    %v330 = vsel %vm179, %v254, 0.0
    %vm331 = vcmask 523264
    %v333 = vsel %vm331, %v330, 0
    %335 = vmatprep.subr.mxu0 0.0
    %336 = vmatpush1.msra.mxu0 %v24
    %337 = vmatprep.subr.mxu0 0.0
    %338 = vmatpush1.msra.mxu0 %v25
    %339 = vmatprep.subr.mxu0 0.0
    %340 = vmatpush1.msra.mxu0 %v26
    %341 = vmatprep.subr.mxu0 0.0
    %342 = vmatpush1.msra.mxu0 %v27
    %343 = vmatprep.subr.mxu0 0.0
    %344 = vmatpush1.msra.mxu0 %v28
    %345 = vmatprep.subr.mxu0 0.0
    %346 = vmatpush1.msra.mxu0 %v29
    %347 = vmatprep.subr.mxu0 0.0
    %348 = vmatpush1.msra.mxu0 %v30
    %349 = vmatprep.subr.mxu0 0.0
    %350 = vmatpush1.msra.mxu0 %v31
    %351 = vmatprep.subr.mxu0 0.0
    %352 = vmatpush1.msra.mxu0 0.0
    %353 = vmatprep.subr.mxu0 0.0
    %354 = vmatpush1.msra.mxu0 0.0
    %355 = vmatprep.subr.mxu0 0.0
    %356 = vmatpush1.msra.mxu0 0.0
    %357 = vmatprep.subr.mxu0 0.0
    %358 = vmatpush1.msra.mxu0 0.0
    %359 = vmatprep.subr.mxu0 0.0
    %360 = vmatpush1.msra.mxu0 0.0
    %361 = vmatprep.subr.mxu0 0.0
    %362 = vmatpush1.msra.mxu0 0.0
    %363 = vmatprep.subr.mxu0 0.0
    %364 = vmatpush1.msra.mxu0 0.0
    %365 = vmatprep.subr.mxu0 0.0
    %366 = vmatpush1.msra.mxu0 0.0
    %367 = vmatprep.subr.mxu0 0.0
    %368 = vmatpush1.msra.mxu0 0.0
    %369 = vmatprep.subr.mxu0 0.0
    %370 = vmatpush1.msra.mxu0 0.0
    %371 = vmatprep.subr.mxu0 0.0
    %372 = vmatpush1.msra.mxu0 0.0
    %373 = vmatprep.subr.mxu0 0.0
    %374 = vmatpush1.msra.mxu0 0.0
    %375 = vmatprep.subr.mxu0 0.0
    %376 = vmatpush1.msra.mxu0 0.0
    %377 = vmatprep.subr.mxu0 0.0
    %378 = vmatpush1.msra.mxu0 0.0
    %379 = vmatprep.subr.mxu0 0.0
    %380 = vmatpush1.msra.mxu0 0.0
    %381 = vmatprep.subr.mxu0 0.0
    %382 = vmatpush1.msra.mxu0 0.0
    %383 = vmatprep.subr.mxu0 0.0
    %384 = vmatpush1.msra.mxu0 0.0
    %385 = vmatprep.subr.mxu0 0.0
    %386 = vmatpush1.msra.mxu0 0.0
    %387 = vmatprep.subr.mxu0 0.0
    %388 = vmatpush1.msra.mxu0 0.0
    %389 = vmatprep.subr.mxu0 0.0
    %390 = vmatpush1.msra.mxu0 0.0
    %391 = vmatprep.subr.mxu0 0.0
    %392 = vmatpush1.msra.mxu0 0.0
    %393 = vmatprep.subr.mxu0 0.0
    %394 = vmatpush1.msra.mxu0 0.0
    %395 = vmatprep.subr.mxu0 0.0
    %396 = vmatpush1.msra.mxu0 0.0
    %397 = vmatprep.subr.mxu0 0.0
    %398 = vmatpush1.msra.mxu0 0.0
    %399 = vmatprep.mubr.f32.mxu0 0.0
    %400 = vmatmul.mubr.f32.gmra.mrb[0].mxu0 %v333
    %v401 = vpop.f32.mrb[0].mxu0
    %v402 = vadd.f32 0.0, %v401
    %v403 = vpop.f32.mrb[0].mxu0
    %404 = vdwg.mxu0
    %v405 = vadd.f32 %v36, %v402
    %v406 = vtanh.pop %v405
    %v408 = vsel %vm179, %v329, 0
    %410 = vmatprep.subr.mxu0 0.0
    %411 = vmatpush1.msra.mxu0 %v20
    %412 = vmatprep.subr.mxu0 0.0
    %413 = vmatpush1.msra.mxu0 %v21
    %414 = vmatprep.subr.mxu0 0.0
    %415 = vmatpush1.msra.mxu0 %v22
    %416 = vmatprep.subr.mxu0 0.0
    %417 = vmatpush1.msra.mxu0 %v23
    %418 = vmatprep.subr.mxu0 0.0
    %419 = vmatpush1.msra.mxu0 0.0
    %420 = vmatprep.subr.mxu0 0.0
    %421 = vmatpush1.msra.mxu0 0.0
    %422 = vmatprep.subr.mxu0 0.0
    %423 = vmatpush1.msra.mxu0 0.0
    %424 = vmatprep.subr.mxu0 0.0
    %425 = vmatpush1.msra.mxu0 0.0
    %426 = vmatprep.subr.mxu0 0.0
    %427 = vmatpush1.msra.mxu0 0.0
    %428 = vmatprep.subr.mxu0 0.0
    %429 = vmatpush1.msra.mxu0 0.0
    %430 = vmatprep.subr.mxu0 0.0
    %431 = vmatpush1.msra.mxu0 0.0
    %432 = vmatprep.subr.mxu0 0.0
    %433 = vmatpush1.msra.mxu0 0.0
    %434 = vmatprep.subr.mxu0 0.0
    %435 = vmatpush1.msra.mxu0 0.0
    %436 = vmatprep.subr.mxu0 0.0
    %437 = vmatpush1.msra.mxu0 0.0
    %438 = vmatprep.subr.mxu0 0.0
    %439 = vmatpush1.msra.mxu0 0.0
    %440 = vmatprep.subr.mxu0 0.0
    %441 = vmatpush1.msra.mxu0 0.0
    %442 = vmatprep.subr.mxu0 0.0
    %443 = vmatpush1.msra.mxu0 0.0
    %444 = vmatprep.subr.mxu0 0.0
    %445 = vmatpush1.msra.mxu0 0.0
    %446 = vmatprep.subr.mxu0 0.0
    %447 = vmatpush1.msra.mxu0 0.0
    %448 = vmatprep.subr.mxu0 0.0
    %449 = vmatpush1.msra.mxu0 0.0
    %450 = vmatprep.subr.mxu0 0.0
    %451 = vmatpush1.msra.mxu0 0.0
    %452 = vmatprep.subr.mxu0 0.0
    %453 = vmatpush1.msra.mxu0 0.0
    %454 = vmatprep.subr.mxu0 0.0
    %455 = vmatpush1.msra.mxu0 0.0
    %456 = vmatprep.subr.mxu0 0.0
    %457 = vmatpush1.msra.mxu0 0.0
    %458 = vmatprep.subr.mxu0 0.0
    %459 = vmatpush1.msra.mxu0 0.0
    %460 = vmatprep.subr.mxu0 0.0
    %461 = vmatpush1.msra.mxu0 0.0
    %462 = vmatprep.subr.mxu0 0.0
    %463 = vmatpush1.msra.mxu0 0.0
    %464 = vmatprep.subr.mxu0 0.0
    %465 = vmatpush1.msra.mxu0 0.0
    %466 = vmatprep.subr.mxu0 0.0
    %467 = vmatpush1.msra.mxu0 0.0
    %468 = vmatprep.subr.mxu0 0.0
    %469 = vmatpush1.msra.mxu0 0.0
    %470 = vmatprep.subr.mxu0 0.0
    %471 = vmatpush1.msra.mxu0 0.0
    %472 = vmatprep.subr.mxu0 0.0
    %473 = vmatpush1.msra.mxu0 0.0
    %474 = vmatprep.mubr.f32.mxu0 0.0
    %475 = vmatmul.mubr.f32.gmra.mrb[0].mxu0 %v408
    %v476 = vpop.f32.mrb[0].mxu0
    %v477 = vadd.f32 0.0, %v476
    %v478 = vpop.f32.mrb[0].mxu0
    %479 = vdwg.mxu0
    %v480 = vadd.f32 %v151, %v477
    %v481 = vtanh.pop %v480
    %483 = vrot.lane.b32.xlu0 %v406, 32
    %v484 = vpop.permute.xlu0 %483
    %v486 = vsel %vm179, %v329, %v484
    %v488 = vsel %vm331, %v486, 0
    %490 = vmatprep.subr.mxu0 0.0
    %491 = vmatpush1.msra.mxu0 %v24
    %492 = vmatprep.subr.mxu0 0.0
    %493 = vmatpush1.msra.mxu0 %v25
    %494 = vmatprep.subr.mxu0 0.0
    %495 = vmatpush1.msra.mxu0 %v26
    %496 = vmatprep.subr.mxu0 0.0
    %497 = vmatpush1.msra.mxu0 %v27
    %498 = vmatprep.subr.mxu0 0.0
    %499 = vmatpush1.msra.mxu0 %v28
    %500 = vmatprep.subr.mxu0 0.0
    %501 = vmatpush1.msra.mxu0 %v29
    %502 = vmatprep.subr.mxu0 0.0
    %503 = vmatpush1.msra.mxu0 %v30
    %504 = vmatprep.subr.mxu0 0.0
    %505 = vmatpush1.msra.mxu0 %v31
    %506 = vmatprep.subr.mxu0 0.0
    %507 = vmatpush1.msra.mxu0 0.0
    %508 = vmatprep.subr.mxu0 0.0
    %509 = vmatpush1.msra.mxu0 0.0
    %510 = vmatprep.subr.mxu0 0.0
    %511 = vmatpush1.msra.mxu0 0.0
    %512 = vmatprep.subr.mxu0 0.0
    %513 = vmatpush1.msra.mxu0 0.0
    %514 = vmatprep.subr.mxu0 0.0
    %515 = vmatpush1.msra.mxu0 0.0
    %516 = vmatprep.subr.mxu0 0.0
    %517 = vmatpush1.msra.mxu0 0.0
    %518 = vmatprep.subr.mxu0 0.0
    %519 = vmatpush1.msra.mxu0 0.0
    %520 = vmatprep.subr.mxu0 0.0
    %521 = vmatpush1.msra.mxu0 0.0
    %522 = vmatprep.subr.mxu0 0.0
    %523 = vmatpush1.msra.mxu0 0.0
    %524 = vmatprep.subr.mxu0 0.0
    %525 = vmatpush1.msra.mxu0 0.0
    %526 = vmatprep.subr.mxu0 0.0
    %527 = vmatpush1.msra.mxu0 0.0
    %528 = vmatprep.subr.mxu0 0.0
    %529 = vmatpush1.msra.mxu0 0.0
    %530 = vmatprep.subr.mxu0 0.0
    %531 = vmatpush1.msra.mxu0 0.0
    %532 = vmatprep.subr.mxu0 0.0
    %533 = vmatpush1.msra.mxu0 0.0
    %534 = vmatprep.subr.mxu0 0.0
    %535 = vmatpush1.msra.mxu0 0.0
    %536 = vmatprep.subr.mxu0 0.0
    %537 = vmatpush1.msra.mxu0 0.0
    %538 = vmatprep.subr.mxu0 0.0
    %539 = vmatpush1.msra.mxu0 0.0
    %540 = vmatprep.subr.mxu0 0.0
    %541 = vmatpush1.msra.mxu0 0.0
    %542 = vmatprep.subr.mxu0 0.0
    %543 = vmatpush1.msra.mxu0 0.0
    %544 = vmatprep.subr.mxu0 0.0
    %545 = vmatpush1.msra.mxu0 0.0
    %546 = vmatprep.subr.mxu0 0.0
    %547 = vmatpush1.msra.mxu0 0.0
    %548 = vmatprep.subr.mxu0 0.0
    %549 = vmatpush1.msra.mxu0 0.0
    %550 = vmatprep.subr.mxu0 0.0
    %551 = vmatpush1.msra.mxu0 0.0
    %552 = vmatprep.subr.mxu0 0.0
    %553 = vmatpush1.msra.mxu0 0.0
    %554 = vmatprep.mubr.f32.mxu0 0.0
    %555 = vmatmul.mubr.f32.gmra.mrb[0].mxu0 %v488
    %v556 = vpop.f32.mrb[0].mxu0
    %v557 = vadd.f32 0.0, %v556
    %v558 = vpop.f32.mrb[0].mxu0
    %559 = vdwg.mxu0
    %v560 = vadd.f32 %v36, %v557
    %v561 = vtanh.pop %v560
    %v563 = vsel %vm179, %v481, 0
    %565 = vmatprep.subr.mxu0 0.0
    %566 = vmatpush1.msra.mxu0 %v20
    %567 = vmatprep.subr.mxu0 0.0
    %568 = vmatpush1.msra.mxu0 %v21
    %569 = vmatprep.subr.mxu0 0.0
    %570 = vmatpush1.msra.mxu0 %v22
    %571 = vmatprep.subr.mxu0 0.0
    %572 = vmatpush1.msra.mxu0 %v23
    %573 = vmatprep.subr.mxu0 0.0
    %574 = vmatpush1.msra.mxu0 0.0
    %575 = vmatprep.subr.mxu0 0.0
    %576 = vmatpush1.msra.mxu0 0.0
    %577 = vmatprep.subr.mxu0 0.0
    %578 = vmatpush1.msra.mxu0 0.0
    %579 = vmatprep.subr.mxu0 0.0
    %580 = vmatpush1.msra.mxu0 0.0
    %581 = vmatprep.subr.mxu0 0.0
    %582 = vmatpush1.msra.mxu0 0.0
    %583 = vmatprep.subr.mxu0 0.0
    %584 = vmatpush1.msra.mxu0 0.0
    %585 = vmatprep.subr.mxu0 0.0
    %586 = vmatpush1.msra.mxu0 0.0
    %587 = vmatprep.subr.mxu0 0.0
    %588 = vmatpush1.msra.mxu0 0.0
    %589 = vmatprep.subr.mxu0 0.0
    %590 = vmatpush1.msra.mxu0 0.0
    %591 = vmatprep.subr.mxu0 0.0
    %592 = vmatpush1.msra.mxu0 0.0
    %593 = vmatprep.subr.mxu0 0.0
    %594 = vmatpush1.msra.mxu0 0.0
    %595 = vmatprep.subr.mxu0 0.0
    %596 = vmatpush1.msra.mxu0 0.0
    %597 = vmatprep.subr.mxu0 0.0
    %598 = vmatpush1.msra.mxu0 0.0
    %599 = vmatprep.subr.mxu0 0.0
    %600 = vmatpush1.msra.mxu0 0.0
    %601 = vmatprep.subr.mxu0 0.0
    %602 = vmatpush1.msra.mxu0 0.0
    %603 = vmatprep.subr.mxu0 0.0
    %604 = vmatpush1.msra.mxu0 0.0
    %605 = vmatprep.subr.mxu0 0.0
    %606 = vmatpush1.msra.mxu0 0.0
    %607 = vmatprep.subr.mxu0 0.0
    %608 = vmatpush1.msra.mxu0 0.0
    %609 = vmatprep.subr.mxu0 0.0
    %610 = vmatpush1.msra.mxu0 0.0
    %611 = vmatprep.subr.mxu0 0.0
    %612 = vmatpush1.msra.mxu0 0.0
    %613 = vmatprep.subr.mxu0 0.0
    %614 = vmatpush1.msra.mxu0 0.0
    %615 = vmatprep.subr.mxu0 0.0
    %616 = vmatpush1.msra.mxu0 0.0
    %617 = vmatprep.subr.mxu0 0.0
    %618 = vmatpush1.msra.mxu0 0.0
    %619 = vmatprep.subr.mxu0 0.0
    %620 = vmatpush1.msra.mxu0 0.0
    %621 = vmatprep.subr.mxu0 0.0
    %622 = vmatpush1.msra.mxu0 0.0
    %623 = vmatprep.subr.mxu0 0.0
    %624 = vmatpush1.msra.mxu0 0.0
    %625 = vmatprep.subr.mxu0 0.0
    %626 = vmatpush1.msra.mxu0 0.0
    %627 = vmatprep.subr.mxu0 0.0
    %628 = vmatpush1.msra.mxu0 0.0
    %629 = vmatprep.mubr.f32.mxu0 0.0
    %630 = vmatmul.mubr.f32.gmra.mrb[0].mxu0 %v563
    %v631 = vpop.f32.mrb[0].mxu0
    %v632 = vadd.f32 0.0, %v631
    %v633 = vpop.f32.mrb[0].mxu0
    %634 = vdwg.mxu0
    %v635 = vadd.f32 %v156, %v632
    %v636 = vtanh.pop %v635
    %638 = vrot.lane.b32.xlu0 %v561, 32
    %v639 = vpop.permute.xlu0 %638
    %v641 = vsel %vm179, %v481, %v639
    %v643 = vsel %vm331, %v641, 0
    %645 = vmatprep.subr.mxu0 0.0
    %646 = vmatpush1.msra.mxu0 %v24
    %647 = vmatprep.subr.mxu0 0.0
    %648 = vmatpush1.msra.mxu0 %v25
    %649 = vmatprep.subr.mxu0 0.0
    %650 = vmatpush1.msra.mxu0 %v26
    %651 = vmatprep.subr.mxu0 0.0
    %652 = vmatpush1.msra.mxu0 %v27
    %653 = vmatprep.subr.mxu0 0.0
    %654 = vmatpush1.msra.mxu0 %v28
    %655 = vmatprep.subr.mxu0 0.0
    %656 = vmatpush1.msra.mxu0 %v29
    %657 = vmatprep.subr.mxu0 0.0
    %658 = vmatpush1.msra.mxu0 %v30
    %659 = vmatprep.subr.mxu0 0.0
    %660 = vmatpush1.msra.mxu0 %v31
    %661 = vmatprep.subr.mxu0 0.0
    %662 = vmatpush1.msra.mxu0 0.0
    %663 = vmatprep.subr.mxu0 0.0
    %664 = vmatpush1.msra.mxu0 0.0
    %665 = vmatprep.subr.mxu0 0.0
    %666 = vmatpush1.msra.mxu0 0.0
    %667 = vmatprep.subr.mxu0 0.0
    %668 = vmatpush1.msra.mxu0 0.0
    %669 = vmatprep.subr.mxu0 0.0
    %670 = vmatpush1.msra.mxu0 0.0
    %671 = vmatprep.subr.mxu0 0.0
    %672 = vmatpush1.msra.mxu0 0.0
    %673 = vmatprep.subr.mxu0 0.0
    %674 = vmatpush1.msra.mxu0 0.0
    %675 = vmatprep.subr.mxu0 0.0
    %676 = vmatpush1.msra.mxu0 0.0
    %677 = vmatprep.subr.mxu0 0.0
    %678 = vmatpush1.msra.mxu0 0.0
    %679 = vmatprep.subr.mxu0 0.0
    %680 = vmatpush1.msra.mxu0 0.0
    %681 = vmatprep.subr.mxu0 0.0
    %682 = vmatpush1.msra.mxu0 0.0
    %683 = vmatprep.subr.mxu0 0.0
    %684 = vmatpush1.msra.mxu0 0.0
    %685 = vmatprep.subr.mxu0 0.0
    %686 = vmatpush1.msra.mxu0 0.0
    %687 = vmatprep.subr.mxu0 0.0
    %688 = vmatpush1.msra.mxu0 0.0
    %689 = vmatprep.subr.mxu0 0.0
    %690 = vmatpush1.msra.mxu0 0.0
    %691 = vmatprep.subr.mxu0 0.0
    %692 = vmatpush1.msra.mxu0 0.0
    %693 = vmatprep.subr.mxu0 0.0
    %694 = vmatpush1.msra.mxu0 0.0
    %695 = vmatprep.subr.mxu0 0.0
    %696 = vmatpush1.msra.mxu0 0.0
    %697 = vmatprep.subr.mxu0 0.0
    %698 = vmatpush1.msra.mxu0 0.0
    %699 = vmatprep.subr.mxu0 0.0
    %700 = vmatpush1.msra.mxu0 0.0
    %701 = vmatprep.subr.mxu0 0.0
    %702 = vmatpush1.msra.mxu0 0.0
    %703 = vmatprep.subr.mxu0 0.0
    %704 = vmatpush1.msra.mxu0 0.0
    %705 = vmatprep.subr.mxu0 0.0
    %706 = vmatpush1.msra.mxu0 0.0
    %707 = vmatprep.subr.mxu0 0.0
    %708 = vmatpush1.msra.mxu0 0.0
    %709 = vmatprep.mubr.f32.mxu0 0.0
    %710 = vmatmul.mubr.f32.gmra.mrb[0].mxu0 %v643
    %v711 = vpop.f32.mrb[0].mxu0
    %v712 = vadd.f32 0.0, %v711
    %v713 = vpop.f32.mrb[0].mxu0
    %714 = vdwg.mxu0
    %v715 = vadd.f32 %v36, %v712
    %v716 = vtanh.pop %v715
    %v718 = vsel %vm179, %v636, 0
    %720 = vmatprep.subr.mxu0 0.0
    %721 = vmatpush1.msra.mxu0 %v20
    %722 = vmatprep.subr.mxu0 0.0
    %723 = vmatpush1.msra.mxu0 %v21
    %724 = vmatprep.subr.mxu0 0.0
    %725 = vmatpush1.msra.mxu0 %v22
    %726 = vmatprep.subr.mxu0 0.0
    %727 = vmatpush1.msra.mxu0 %v23
    %728 = vmatprep.subr.mxu0 0.0
    %729 = vmatpush1.msra.mxu0 0.0
    %730 = vmatprep.subr.mxu0 0.0
    %731 = vmatpush1.msra.mxu0 0.0
    %732 = vmatprep.subr.mxu0 0.0
    %733 = vmatpush1.msra.mxu0 0.0
    %734 = vmatprep.subr.mxu0 0.0
    %735 = vmatpush1.msra.mxu0 0.0
    %736 = vmatprep.subr.mxu0 0.0
    %737 = vmatpush1.msra.mxu0 0.0
    %738 = vmatprep.subr.mxu0 0.0
    %739 = vmatpush1.msra.mxu0 0.0
    %740 = vmatprep.subr.mxu0 0.0
    %741 = vmatpush1.msra.mxu0 0.0
    %742 = vmatprep.subr.mxu0 0.0
    %743 = vmatpush1.msra.mxu0 0.0
    %744 = vmatprep.subr.mxu0 0.0
    %745 = vmatpush1.msra.mxu0 0.0
    %746 = vmatprep.subr.mxu0 0.0
    %747 = vmatpush1.msra.mxu0 0.0
    %748 = vmatprep.subr.mxu0 0.0
    %749 = vmatpush1.msra.mxu0 0.0
    %750 = vmatprep.subr.mxu0 0.0
    %751 = vmatpush1.msra.mxu0 0.0
    %752 = vmatprep.subr.mxu0 0.0
    %753 = vmatpush1.msra.mxu0 0.0
    %754 = vmatprep.subr.mxu0 0.0
    %755 = vmatpush1.msra.mxu0 0.0
    %756 = vmatprep.subr.mxu0 0.0
    %757 = vmatpush1.msra.mxu0 0.0
    %758 = vmatprep.subr.mxu0 0.0
    %759 = vmatpush1.msra.mxu0 0.0
    %760 = vmatprep.subr.mxu0 0.0
    %761 = vmatpush1.msra.mxu0 0.0
    %762 = vmatprep.subr.mxu0 0.0
    %763 = vmatpush1.msra.mxu0 0.0
    %764 = vmatprep.subr.mxu0 0.0
    %765 = vmatpush1.msra.mxu0 0.0
    %766 = vmatprep.subr.mxu0 0.0
    %767 = vmatpush1.msra.mxu0 0.0
    %768 = vmatprep.subr.mxu0 0.0
    %769 = vmatpush1.msra.mxu0 0.0
    %770 = vmatprep.subr.mxu0 0.0
    %771 = vmatpush1.msra.mxu0 0.0
    %772 = vmatprep.subr.mxu0 0.0
    %773 = vmatpush1.msra.mxu0 0.0
    %774 = vmatprep.subr.mxu0 0.0
    %775 = vmatpush1.msra.mxu0 0.0
    %776 = vmatprep.subr.mxu0 0.0
    %777 = vmatpush1.msra.mxu0 0.0
    %778 = vmatprep.subr.mxu0 0.0
    %779 = vmatpush1.msra.mxu0 0.0
    %780 = vmatprep.subr.mxu0 0.0
    %781 = vmatpush1.msra.mxu0 0.0
    %782 = vmatprep.subr.mxu0 0.0
    %783 = vmatpush1.msra.mxu0 0.0
    %784 = vmatprep.mubr.f32.mxu0 0.0
    %785 = vmatmul.mubr.f32.gmra.mrb[0].mxu0 %v718
    %v786 = vpop.f32.mrb[0].mxu0
    %v787 = vadd.f32 0.0, %v786
    %v788 = vpop.f32.mrb[0].mxu0
    %789 = vdwg.mxu0
    %v790 = vadd.f32 %v161, %v787
    %v791 = vtanh.pop %v790
    %793 = vrot.lane.b32.xlu0 %v716, 32
    %v794 = vpop.permute.xlu0 %793
    %v796 = vsel %vm179, %v636, %v794
    %v798 = vsel %vm331, %v796, 0
    %800 = vmatprep.subr.mxu0 0.0
    %801 = vmatpush1.msra.mxu0 %v24
    %802 = vmatprep.subr.mxu0 0.0
    %803 = vmatpush1.msra.mxu0 %v25
    %804 = vmatprep.subr.mxu0 0.0
    %805 = vmatpush1.msra.mxu0 %v26
    %806 = vmatprep.subr.mxu0 0.0
    %807 = vmatpush1.msra.mxu0 %v27
    %808 = vmatprep.subr.mxu0 0.0
    %809 = vmatpush1.msra.mxu0 %v28
    %810 = vmatprep.subr.mxu0 0.0
    %811 = vmatpush1.msra.mxu0 %v29
    %812 = vmatprep.subr.mxu0 0.0
    %813 = vmatpush1.msra.mxu0 %v30
    %814 = vmatprep.subr.mxu0 0.0
    %815 = vmatpush1.msra.mxu0 %v31
    %816 = vmatprep.subr.mxu0 0.0
    %817 = vmatpush1.msra.mxu0 0.0
    %818 = vmatprep.subr.mxu0 0.0
    %819 = vmatpush1.msra.mxu0 0.0
    %820 = vmatprep.subr.mxu0 0.0
    %821 = vmatpush1.msra.mxu0 0.0
    %822 = vmatprep.subr.mxu0 0.0
    %823 = vmatpush1.msra.mxu0 0.0
    %824 = vmatprep.subr.mxu0 0.0
    %825 = vmatpush1.msra.mxu0 0.0
    %826 = vmatprep.subr.mxu0 0.0
    %827 = vmatpush1.msra.mxu0 0.0
    %828 = vmatprep.subr.mxu0 0.0
    %829 = vmatpush1.msra.mxu0 0.0
    %830 = vmatprep.subr.mxu0 0.0
    %831 = vmatpush1.msra.mxu0 0.0
    %832 = vmatprep.subr.mxu0 0.0
    %833 = vmatpush1.msra.mxu0 0.0
    %834 = vmatprep.subr.mxu0 0.0
    %835 = vmatpush1.msra.mxu0 0.0
    %836 = vmatprep.subr.mxu0 0.0
    %837 = vmatpush1.msra.mxu0 0.0
    %838 = vmatprep.subr.mxu0 0.0
    %839 = vmatpush1.msra.mxu0 0.0
    %840 = vmatprep.subr.mxu0 0.0
    %841 = vmatpush1.msra.mxu0 0.0
    %842 = vmatprep.subr.mxu0 0.0
    %843 = vmatpush1.msra.mxu0 0.0
    %844 = vmatprep.subr.mxu0 0.0
    %845 = vmatpush1.msra.mxu0 0.0
    %846 = vmatprep.subr.mxu0 0.0
    %847 = vmatpush1.msra.mxu0 0.0
    %848 = vmatprep.subr.mxu0 0.0
    %849 = vmatpush1.msra.mxu0 0.0
    %850 = vmatprep.subr.mxu0 0.0
    %851 = vmatpush1.msra.mxu0 0.0
    %852 = vmatprep.subr.mxu0 0.0
    %853 = vmatpush1.msra.mxu0 0.0
    %854 = vmatprep.subr.mxu0 0.0
    %855 = vmatpush1.msra.mxu0 0.0
    %856 = vmatprep.subr.mxu0 0.0
    %857 = vmatpush1.msra.mxu0 0.0
    %858 = vmatprep.subr.mxu0 0.0
    %859 = vmatpush1.msra.mxu0 0.0
    %860 = vmatprep.subr.mxu0 0.0
    %861 = vmatpush1.msra.mxu0 0.0
    %862 = vmatprep.subr.mxu0 0.0
    %863 = vmatpush1.msra.mxu0 0.0
    %864 = vmatprep.mubr.f32.mxu0 0.0
    %865 = vmatmul.mubr.f32.gmra.mrb[0].mxu0 %v798
    %v866 = vpop.f32.mrb[0].mxu0
    %v867 = vadd.f32 0.0, %v866
    %v868 = vpop.f32.mrb[0].mxu0
    %869 = vdwg.mxu0
    %v870 = vadd.f32 %v36, %v867
    %v871 = vtanh.pop %v870
    %v873 = vsel %vm179, %v791, 0
    %875 = vmatprep.subr.mxu0 0.0
    %876 = vmatpush1.msra.mxu0 %v20
    %877 = vmatprep.subr.mxu0 0.0
    %878 = vmatpush1.msra.mxu0 %v21
    %879 = vmatprep.subr.mxu0 0.0
    %880 = vmatpush1.msra.mxu0 %v22
    %881 = vmatprep.subr.mxu0 0.0
    %882 = vmatpush1.msra.mxu0 %v23
    %883 = vmatprep.subr.mxu0 0.0
    %884 = vmatpush1.msra.mxu0 0.0
    %885 = vmatprep.subr.mxu0 0.0
    %886 = vmatpush1.msra.mxu0 0.0
    %887 = vmatprep.subr.mxu0 0.0
    %888 = vmatpush1.msra.mxu0 0.0
    %889 = vmatprep.subr.mxu0 0.0
    %890 = vmatpush1.msra.mxu0 0.0
    %891 = vmatprep.subr.mxu0 0.0
    %892 = vmatpush1.msra.mxu0 0.0
    %893 = vmatprep.subr.mxu0 0.0
    %894 = vmatpush1.msra.mxu0 0.0
    %895 = vmatprep.subr.mxu0 0.0
    %896 = vmatpush1.msra.mxu0 0.0
    %897 = vmatprep.subr.mxu0 0.0
    %898 = vmatpush1.msra.mxu0 0.0
    %899 = vmatprep.subr.mxu0 0.0
    %900 = vmatpush1.msra.mxu0 0.0
    %901 = vmatprep.subr.mxu0 0.0
    %902 = vmatpush1.msra.mxu0 0.0
    %903 = vmatprep.subr.mxu0 0.0
    %904 = vmatpush1.msra.mxu0 0.0
    %905 = vmatprep.subr.mxu0 0.0
    %906 = vmatpush1.msra.mxu0 0.0
    %907 = vmatprep.subr.mxu0 0.0
    %908 = vmatpush1.msra.mxu0 0.0
    %909 = vmatprep.subr.mxu0 0.0
    %910 = vmatpush1.msra.mxu0 0.0
    %911 = vmatprep.subr.mxu0 0.0
    %912 = vmatpush1.msra.mxu0 0.0
    %913 = vmatprep.subr.mxu0 0.0
    %914 = vmatpush1.msra.mxu0 0.0
    %915 = vmatprep.subr.mxu0 0.0
    %916 = vmatpush1.msra.mxu0 0.0
    %917 = vmatprep.subr.mxu0 0.0
    %918 = vmatpush1.msra.mxu0 0.0
    %919 = vmatprep.subr.mxu0 0.0
    %920 = vmatpush1.msra.mxu0 0.0
    %921 = vmatprep.subr.mxu0 0.0
    %922 = vmatpush1.msra.mxu0 0.0
    %923 = vmatprep.subr.mxu0 0.0
    %924 = vmatpush1.msra.mxu0 0.0
    %925 = vmatprep.subr.mxu0 0.0
    %926 = vmatpush1.msra.mxu0 0.0
    %927 = vmatprep.subr.mxu0 0.0
    %928 = vmatpush1.msra.mxu0 0.0
    %929 = vmatprep.subr.mxu0 0.0
    %930 = vmatpush1.msra.mxu0 0.0
    %931 = vmatprep.subr.mxu0 0.0
    %932 = vmatpush1.msra.mxu0 0.0
    %933 = vmatprep.subr.mxu0 0.0
    %934 = vmatpush1.msra.mxu0 0.0
    %935 = vmatprep.subr.mxu0 0.0
    %936 = vmatpush1.msra.mxu0 0.0
    %937 = vmatprep.subr.mxu0 0.0
    %938 = vmatpush1.msra.mxu0 0.0
    %939 = vmatprep.mubr.f32.mxu0 0.0
    %940 = vmatmul.mubr.f32.gmra.mrb[0].mxu0 %v873
    %v941 = vpop.f32.mrb[0].mxu0
    %v942 = vadd.f32 0.0, %v941
    %v943 = vpop.f32.mrb[0].mxu0
    %944 = vdwg.mxu0
    %v945 = vadd.f32 %v166, %v942
    %v946 = vtanh.pop %v945
    %948 = vrot.lane.b32.xlu0 %v871, 32
    %v949 = vpop.permute.xlu0 %948
    %v951 = vsel %vm179, %v791, %v949
    %v953 = vsel %vm331, %v951, 0
    %955 = vmatprep.subr.mxu0 0.0
    %956 = vmatpush1.msra.mxu0 %v24
    %957 = vmatprep.subr.mxu0 0.0
    %958 = vmatpush1.msra.mxu0 %v25
    %959 = vmatprep.subr.mxu0 0.0
    %960 = vmatpush1.msra.mxu0 %v26
    %961 = vmatprep.subr.mxu0 0.0
    %962 = vmatpush1.msra.mxu0 %v27
    %963 = vmatprep.subr.mxu0 0.0
    %964 = vmatpush1.msra.mxu0 %v28
    %965 = vmatprep.subr.mxu0 0.0
    %966 = vmatpush1.msra.mxu0 %v29
    %967 = vmatprep.subr.mxu0 0.0
    %968 = vmatpush1.msra.mxu0 %v30
    %969 = vmatprep.subr.mxu0 0.0
    %970 = vmatpush1.msra.mxu0 %v31
    %971 = vmatprep.subr.mxu0 0.0
    %972 = vmatpush1.msra.mxu0 0.0
    %973 = vmatprep.subr.mxu0 0.0
    %974 = vmatpush1.msra.mxu0 0.0
    %975 = vmatprep.subr.mxu0 0.0
    %976 = vmatpush1.msra.mxu0 0.0
    %977 = vmatprep.subr.mxu0 0.0
    %978 = vmatpush1.msra.mxu0 0.0
    %979 = vmatprep.subr.mxu0 0.0
    %980 = vmatpush1.msra.mxu0 0.0
    %981 = vmatprep.subr.mxu0 0.0
    %982 = vmatpush1.msra.mxu0 0.0
    %983 = vmatprep.subr.mxu0 0.0
    %984 = vmatpush1.msra.mxu0 0.0
    %985 = vmatprep.subr.mxu0 0.0
    %986 = vmatpush1.msra.mxu0 0.0
    %987 = vmatprep.subr.mxu0 0.0
    %988 = vmatpush1.msra.mxu0 0.0
    %989 = vmatprep.subr.mxu0 0.0
    %990 = vmatpush1.msra.mxu0 0.0
    %991 = vmatprep.subr.mxu0 0.0
    %992 = vmatpush1.msra.mxu0 0.0
    %993 = vmatprep.subr.mxu0 0.0
    %994 = vmatpush1.msra.mxu0 0.0
    %995 = vmatprep.subr.mxu0 0.0
    %996 = vmatpush1.msra.mxu0 0.0
    %997 = vmatprep.subr.mxu0 0.0
    %998 = vmatpush1.msra.mxu0 0.0
    %999 = vmatprep.subr.mxu0 0.0
    %1000 = vmatpush1.msra.mxu0 0.0
    %1001 = vmatprep.subr.mxu0 0.0
    %1002 = vmatpush1.msra.mxu0 0.0
    %1003 = vmatprep.subr.mxu0 0.0
    %1004 = vmatpush1.msra.mxu0 0.0
    %1005 = vmatprep.subr.mxu0 0.0
    %1006 = vmatpush1.msra.mxu0 0.0
    %1007 = vmatprep.subr.mxu0 0.0
    %1008 = vmatpush1.msra.mxu0 0.0
    %1009 = vmatprep.subr.mxu0 0.0
    %1010 = vmatpush1.msra.mxu0 0.0
    %1011 = vmatprep.subr.mxu0 0.0
    %1012 = vmatpush1.msra.mxu0 0.0
    %1013 = vmatprep.subr.mxu0 0.0
    %1014 = vmatpush1.msra.mxu0 0.0
    %1015 = vmatprep.subr.mxu0 0.0
    %1016 = vmatpush1.msra.mxu0 0.0
    %1017 = vmatprep.subr.mxu0 0.0
    %1018 = vmatpush1.msra.mxu0 0.0
    %1019 = vmatprep.mubr.f32.mxu0 0.0
    %1020 = vmatmul.mubr.f32.gmra.mrb[0].mxu0 %v953
    %v1021 = vpop.f32.mrb[0].mxu0
    %v1022 = vadd.f32 0.0, %v1021
    %v1023 = vpop.f32.mrb[0].mxu0
    %1024 = vdwg.mxu0
    %v1025 = vadd.f32 %v36, %v1022
    %v1026 = vtanh.pop %v1025
    %v1028 = vsel %vm179, %v946, 0
    %1030 = vmatprep.subr.mxu0 0.0
    %1031 = vmatpush1.msra.mxu0 %v20
    %1032 = vmatprep.subr.mxu0 0.0
    %1033 = vmatpush1.msra.mxu0 %v21
    %1034 = vmatprep.subr.mxu0 0.0
    %1035 = vmatpush1.msra.mxu0 %v22
    %1036 = vmatprep.subr.mxu0 0.0
    %1037 = vmatpush1.msra.mxu0 %v23
    %1038 = vmatprep.subr.mxu0 0.0
    %1039 = vmatpush1.msra.mxu0 0.0
    %1040 = vmatprep.subr.mxu0 0.0
    %1041 = vmatpush1.msra.mxu0 0.0
    %1042 = vmatprep.subr.mxu0 0.0
    %1043 = vmatpush1.msra.mxu0 0.0
    %1044 = vmatprep.subr.mxu0 0.0
    %1045 = vmatpush1.msra.mxu0 0.0
    %1046 = vmatprep.subr.mxu0 0.0
    %1047 = vmatpush1.msra.mxu0 0.0
    %1048 = vmatprep.subr.mxu0 0.0
    %1049 = vmatpush1.msra.mxu0 0.0
    %1050 = vmatprep.subr.mxu0 0.0
    %1051 = vmatpush1.msra.mxu0 0.0
    %1052 = vmatprep.subr.mxu0 0.0
    %1053 = vmatpush1.msra.mxu0 0.0
    %1054 = vmatprep.subr.mxu0 0.0
    %1055 = vmatpush1.msra.mxu0 0.0
    %1056 = vmatprep.subr.mxu0 0.0
    %1057 = vmatpush1.msra.mxu0 0.0
    %1058 = vmatprep.subr.mxu0 0.0
    %1059 = vmatpush1.msra.mxu0 0.0
    %1060 = vmatprep.subr.mxu0 0.0
    %1061 = vmatpush1.msra.mxu0 0.0
    %1062 = vmatprep.subr.mxu0 0.0
    %1063 = vmatpush1.msra.mxu0 0.0
    %1064 = vmatprep.subr.mxu0 0.0
    %1065 = vmatpush1.msra.mxu0 0.0
    %1066 = vmatprep.subr.mxu0 0.0
    %1067 = vmatpush1.msra.mxu0 0.0
    %1068 = vmatprep.subr.mxu0 0.0
    %1069 = vmatpush1.msra.mxu0 0.0
    %1070 = vmatprep.subr.mxu0 0.0
    %1071 = vmatpush1.msra.mxu0 0.0
    %1072 = vmatprep.subr.mxu0 0.0
    %1073 = vmatpush1.msra.mxu0 0.0
    %1074 = vmatprep.subr.mxu0 0.0
    %1075 = vmatpush1.msra.mxu0 0.0
    %1076 = vmatprep.subr.mxu0 0.0
    %1077 = vmatpush1.msra.mxu0 0.0
    %1078 = vmatprep.subr.mxu0 0.0
    %1079 = vmatpush1.msra.mxu0 0.0
    %1080 = vmatprep.subr.mxu0 0.0
    %1081 = vmatpush1.msra.mxu0 0.0
    %1082 = vmatprep.subr.mxu0 0.0
    %1083 = vmatpush1.msra.mxu0 0.0
    %1084 = vmatprep.subr.mxu0 0.0
    %1085 = vmatpush1.msra.mxu0 0.0
    %1086 = vmatprep.subr.mxu0 0.0
    %1087 = vmatpush1.msra.mxu0 0.0
    %1088 = vmatprep.subr.mxu0 0.0
    %1089 = vmatpush1.msra.mxu0 0.0
    %1090 = vmatprep.subr.mxu0 0.0
    %1091 = vmatpush1.msra.mxu0 0.0
    %1092 = vmatprep.subr.mxu0 0.0
    %1093 = vmatpush1.msra.mxu0 0.0
    %1094 = vmatprep.mubr.f32.mxu0 0.0
    %1095 = vmatmul.mubr.f32.gmra.mrb[0].mxu0 %v1028
    %v1096 = vpop.f32.mrb[0].mxu0
    %v1097 = vadd.f32 0.0, %v1096
    %v1098 = vpop.f32.mrb[0].mxu0
    %1099 = vdwg.mxu0
    %v1100 = vadd.f32 %v171, %v1097
    %v1101 = vtanh.pop %v1100
    %1103 = vrot.lane.b32.xlu0 %v1026, 32
    %v1104 = vpop.permute.xlu0 %1103
    %v1106 = vsel %vm179, %v946, %v1104
    %v1108 = vsel %vm331, %v1106, 0
    %1110 = vmatprep.subr.mxu0 0.0
    %1111 = vmatpush1.msra.mxu0 %v24
    %1112 = vmatprep.subr.mxu0 0.0
    %1113 = vmatpush1.msra.mxu0 %v25
    %1114 = vmatprep.subr.mxu0 0.0
    %1115 = vmatpush1.msra.mxu0 %v26
    %1116 = vmatprep.subr.mxu0 0.0
    %1117 = vmatpush1.msra.mxu0 %v27
    %1118 = vmatprep.subr.mxu0 0.0
    %1119 = vmatpush1.msra.mxu0 %v28
    %1120 = vmatprep.subr.mxu0 0.0
    %1121 = vmatpush1.msra.mxu0 %v29
    %1122 = vmatprep.subr.mxu0 0.0
    %1123 = vmatpush1.msra.mxu0 %v30
    %1124 = vmatprep.subr.mxu0 0.0
    %1125 = vmatpush1.msra.mxu0 %v31
    %1126 = vmatprep.subr.mxu0 0.0
    %1127 = vmatpush1.msra.mxu0 0.0
    %1128 = vmatprep.subr.mxu0 0.0
    %1129 = vmatpush1.msra.mxu0 0.0
    %1130 = vmatprep.subr.mxu0 0.0
    %1131 = vmatpush1.msra.mxu0 0.0
    %1132 = vmatprep.subr.mxu0 0.0
    %1133 = vmatpush1.msra.mxu0 0.0
    %1134 = vmatprep.subr.mxu0 0.0
    %1135 = vmatpush1.msra.mxu0 0.0
    %1136 = vmatprep.subr.mxu0 0.0
    %1137 = vmatpush1.msra.mxu0 0.0
    %1138 = vmatprep.subr.mxu0 0.0
    %1139 = vmatpush1.msra.mxu0 0.0
    %1140 = vmatprep.subr.mxu0 0.0
    %1141 = vmatpush1.msra.mxu0 0.0
    %1142 = vmatprep.subr.mxu0 0.0
    %1143 = vmatpush1.msra.mxu0 0.0
    %1144 = vmatprep.subr.mxu0 0.0
    %1145 = vmatpush1.msra.mxu0 0.0
    %1146 = vmatprep.subr.mxu0 0.0
    %1147 = vmatpush1.msra.mxu0 0.0
    %1148 = vmatprep.subr.mxu0 0.0
    %1149 = vmatpush1.msra.mxu0 0.0
    %1150 = vmatprep.subr.mxu0 0.0
    %1151 = vmatpush1.msra.mxu0 0.0
    %1152 = vmatprep.subr.mxu0 0.0
    %1153 = vmatpush1.msra.mxu0 0.0
    %1154 = vmatprep.subr.mxu0 0.0
    %1155 = vmatpush1.msra.mxu0 0.0
    %1156 = vmatprep.subr.mxu0 0.0
    %1157 = vmatpush1.msra.mxu0 0.0
    %1158 = vmatprep.subr.mxu0 0.0
    %1159 = vmatpush1.msra.mxu0 0.0
    %1160 = vmatprep.subr.mxu0 0.0
    %1161 = vmatpush1.msra.mxu0 0.0
    %1162 = vmatprep.subr.mxu0 0.0
    %1163 = vmatpush1.msra.mxu0 0.0
    %1164 = vmatprep.subr.mxu0 0.0
    %1165 = vmatpush1.msra.mxu0 0.0
    %1166 = vmatprep.subr.mxu0 0.0
    %1167 = vmatpush1.msra.mxu0 0.0
    %1168 = vmatprep.subr.mxu0 0.0
    %1169 = vmatpush1.msra.mxu0 0.0
    %1170 = vmatprep.subr.mxu0 0.0
    %1171 = vmatpush1.msra.mxu0 0.0
    %1172 = vmatprep.subr.mxu0 0.0
    %1173 = vmatpush1.msra.mxu0 0.0
    %1174 = vmatprep.mubr.f32.mxu0 0.0
    %1175 = vmatmul.mubr.f32.gmra.mrb[0].mxu0 %v1108
    %v1176 = vpop.f32.mrb[0].mxu0
    %v1177 = vadd.f32 0.0, %v1176
    %v1178 = vpop.f32.mrb[0].mxu0
    %1179 = vdwg.mxu0
    %v1180 = vadd.f32 %v36, %v1177
    %v1181 = vtanh.pop %v1180
    %v1183 = vsel %vm179, %v1101, 0
    %1185 = vmatprep.subr.mxu0 0.0
    %1186 = vmatpush1.msra.mxu0 %v20
    %1187 = vmatprep.subr.mxu0 0.0
    %1188 = vmatpush1.msra.mxu0 %v21
    %1189 = vmatprep.subr.mxu0 0.0
    %1190 = vmatpush1.msra.mxu0 %v22
    %1191 = vmatprep.subr.mxu0 0.0
    %1192 = vmatpush1.msra.mxu0 %v23
    %1193 = vmatprep.subr.mxu0 0.0
    %1194 = vmatpush1.msra.mxu0 0.0
    %1195 = vmatprep.subr.mxu0 0.0
    %1196 = vmatpush1.msra.mxu0 0.0
    %1197 = vmatprep.subr.mxu0 0.0
    %1198 = vmatpush1.msra.mxu0 0.0
    %1199 = vmatprep.subr.mxu0 0.0
    %1200 = vmatpush1.msra.mxu0 0.0
    %1201 = vmatprep.subr.mxu0 0.0
    %1202 = vmatpush1.msra.mxu0 0.0
    %1203 = vmatprep.subr.mxu0 0.0
    %1204 = vmatpush1.msra.mxu0 0.0
    %1205 = vmatprep.subr.mxu0 0.0
    %1206 = vmatpush1.msra.mxu0 0.0
    %1207 = vmatprep.subr.mxu0 0.0
    %1208 = vmatpush1.msra.mxu0 0.0
    %1209 = vmatprep.subr.mxu0 0.0
    %1210 = vmatpush1.msra.mxu0 0.0
    %1211 = vmatprep.subr.mxu0 0.0
    %1212 = vmatpush1.msra.mxu0 0.0
    %1213 = vmatprep.subr.mxu0 0.0
    %1214 = vmatpush1.msra.mxu0 0.0
    %1215 = vmatprep.subr.mxu0 0.0
    %1216 = vmatpush1.msra.mxu0 0.0
    %1217 = vmatprep.subr.mxu0 0.0
    %1218 = vmatpush1.msra.mxu0 0.0
    %1219 = vmatprep.subr.mxu0 0.0
    %1220 = vmatpush1.msra.mxu0 0.0
    %1221 = vmatprep.subr.mxu0 0.0
    %1222 = vmatpush1.msra.mxu0 0.0
    %1223 = vmatprep.subr.mxu0 0.0
    %1224 = vmatpush1.msra.mxu0 0.0
    %1225 = vmatprep.subr.mxu0 0.0
    %1226 = vmatpush1.msra.mxu0 0.0
    %1227 = vmatprep.subr.mxu0 0.0
    %1228 = vmatpush1.msra.mxu0 0.0
    %1229 = vmatprep.subr.mxu0 0.0
    %1230 = vmatpush1.msra.mxu0 0.0
    %1231 = vmatprep.subr.mxu0 0.0
    %1232 = vmatpush1.msra.mxu0 0.0
    %1233 = vmatprep.subr.mxu0 0.0
    %1234 = vmatpush1.msra.mxu0 0.0
    %1235 = vmatprep.subr.mxu0 0.0
    %1236 = vmatpush1.msra.mxu0 0.0
    %1237 = vmatprep.subr.mxu0 0.0
    %1238 = vmatpush1.msra.mxu0 0.0
    %1239 = vmatprep.subr.mxu0 0.0
    %1240 = vmatpush1.msra.mxu0 0.0
    %1241 = vmatprep.subr.mxu0 0.0
    %1242 = vmatpush1.msra.mxu0 0.0
    %1243 = vmatprep.subr.mxu0 0.0
    %1244 = vmatpush1.msra.mxu0 0.0
    %1245 = vmatprep.subr.mxu0 0.0
    %1246 = vmatpush1.msra.mxu0 0.0
    %1247 = vmatprep.subr.mxu0 0.0
    %1248 = vmatpush1.msra.mxu0 0.0
    %1249 = vmatprep.mubr.f32.mxu0 0.0
    %1250 = vmatmul.mubr.f32.gmra.mrb[0].mxu0 %v1183
    %v1251 = vpop.f32.mrb[0].mxu0
    %v1252 = vadd.f32 0.0, %v1251
    %v1253 = vpop.f32.mrb[0].mxu0
    %1254 = vdwg.mxu0
    %v1255 = vadd.f32 %v176, %v1252
    %v1256 = vtanh.pop %v1255
    %1258 = vrot.lane.b32.xlu0 %v1181, 32
    %v1259 = vpop.permute.xlu0 %1258
    %v1261 = vsel %vm179, %v1101, %v1259
    %v1263 = vsel %vm331, %v1261, 0
    %1265 = vmatprep.subr.mxu0 0.0
    %1266 = vmatpush1.msra.mxu0 %v24
    %1267 = vmatprep.subr.mxu0 0.0
    %1268 = vmatpush1.msra.mxu0 %v25
    %1269 = vmatprep.subr.mxu0 0.0
    %1270 = vmatpush1.msra.mxu0 %v26
    %1271 = vmatprep.subr.mxu0 0.0
    %1272 = vmatpush1.msra.mxu0 %v27
    %1273 = vmatprep.subr.mxu0 0.0
    %1274 = vmatpush1.msra.mxu0 %v28
    %1275 = vmatprep.subr.mxu0 0.0
    %1276 = vmatpush1.msra.mxu0 %v29
    %1277 = vmatprep.subr.mxu0 0.0
    %1278 = vmatpush1.msra.mxu0 %v30
    %1279 = vmatprep.subr.mxu0 0.0
    %1280 = vmatpush1.msra.mxu0 %v31
    %1281 = vmatprep.subr.mxu0 0.0
    %1282 = vmatpush1.msra.mxu0 0.0
    %1283 = vmatprep.subr.mxu0 0.0
    %1284 = vmatpush1.msra.mxu0 0.0
    %1285 = vmatprep.subr.mxu0 0.0
    %1286 = vmatpush1.msra.mxu0 0.0
    %1287 = vmatprep.subr.mxu0 0.0
    %1288 = vmatpush1.msra.mxu0 0.0
    %1289 = vmatprep.subr.mxu0 0.0
    %1290 = vmatpush1.msra.mxu0 0.0
    %1291 = vmatprep.subr.mxu0 0.0
    %1292 = vmatpush1.msra.mxu0 0.0
    %1293 = vmatprep.subr.mxu0 0.0
    %1294 = vmatpush1.msra.mxu0 0.0
    %1295 = vmatprep.subr.mxu0 0.0
    %1296 = vmatpush1.msra.mxu0 0.0
    %1297 = vmatprep.subr.mxu0 0.0
    %1298 = vmatpush1.msra.mxu0 0.0
    %1299 = vmatprep.subr.mxu0 0.0
    %1300 = vmatpush1.msra.mxu0 0.0
    %1301 = vmatprep.subr.mxu0 0.0
    %1302 = vmatpush1.msra.mxu0 0.0
    %1303 = vmatprep.subr.mxu0 0.0
    %1304 = vmatpush1.msra.mxu0 0.0
    %1305 = vmatprep.subr.mxu0 0.0
    %1306 = vmatpush1.msra.mxu0 0.0
    %1307 = vmatprep.subr.mxu0 0.0
    %1308 = vmatpush1.msra.mxu0 0.0
    %1309 = vmatprep.subr.mxu0 0.0
    %1310 = vmatpush1.msra.mxu0 0.0
    %1311 = vmatprep.subr.mxu0 0.0
    %1312 = vmatpush1.msra.mxu0 0.0
    %1313 = vmatprep.subr.mxu0 0.0
    %1314 = vmatpush1.msra.mxu0 0.0
    %1315 = vmatprep.subr.mxu0 0.0
    %1316 = vmatpush1.msra.mxu0 0.0
    %1317 = vmatprep.subr.mxu0 0.0
    %1318 = vmatpush1.msra.mxu0 0.0
    %1319 = vmatprep.subr.mxu0 0.0
    %1320 = vmatpush1.msra.mxu0 0.0
    %1321 = vmatprep.subr.mxu0 0.0
    %1322 = vmatpush1.msra.mxu0 0.0
    %1323 = vmatprep.subr.mxu0 0.0
    %1324 = vmatpush1.msra.mxu0 0.0
    %1325 = vmatprep.subr.mxu0 0.0
    %1326 = vmatpush1.msra.mxu0 0.0
    %1327 = vmatprep.subr.mxu0 0.0
    %1328 = vmatpush1.msra.mxu0 0.0
    %1329 = vmatprep.mubr.f32.mxu0 0.0
    %1330 = vmatmul.mubr.f32.gmra.mrb[0].mxu0 %v1263
    %v1331 = vpop.f32.mrb[0].mxu0
    %v1332 = vadd.f32 0.0, %v1331
    %v1333 = vpop.f32.mrb[0].mxu0
    %1334 = vdwg.mxu0
    %v1335 = vadd.f32 %v36, %v1332
    %v1336 = vtanh.pop %v1335
    %1338 = vrot.lane.b32.xlu0 %v1336, 32
    %v1339 = vpop.permute.xlu0 %1338
    %v1341 = vsel %vm179, %v1256, %v1339
    %v1343 = vsel %vm331, %v1341, 0
    %1345 = vmatprep.subr.mxu0 0.0
    %1346 = vmatpush1.msra.mxu0 %v24
    %1347 = vmatprep.subr.mxu0 0.0
    %1348 = vmatpush1.msra.mxu0 %v25
    %1349 = vmatprep.subr.mxu0 0.0
    %1350 = vmatpush1.msra.mxu0 %v26
    %1351 = vmatprep.subr.mxu0 0.0
    %1352 = vmatpush1.msra.mxu0 %v27
    %1353 = vmatprep.subr.mxu0 0.0
    %1354 = vmatpush1.msra.mxu0 %v28
    %1355 = vmatprep.subr.mxu0 0.0
    %1356 = vmatpush1.msra.mxu0 %v29
    %1357 = vmatprep.subr.mxu0 0.0
    %1358 = vmatpush1.msra.mxu0 %v30
    %1359 = vmatprep.subr.mxu0 0.0
    %1360 = vmatpush1.msra.mxu0 %v31
    %1361 = vmatprep.subr.mxu0 0.0
    %1362 = vmatpush1.msra.mxu0 0.0
    %1363 = vmatprep.subr.mxu0 0.0
    %1364 = vmatpush1.msra.mxu0 0.0
    %1365 = vmatprep.subr.mxu0 0.0
    %1366 = vmatpush1.msra.mxu0 0.0
    %1367 = vmatprep.subr.mxu0 0.0
    %1368 = vmatpush1.msra.mxu0 0.0
    %1369 = vmatprep.subr.mxu0 0.0
    %1370 = vmatpush1.msra.mxu0 0.0
    %1371 = vmatprep.subr.mxu0 0.0
    %1372 = vmatpush1.msra.mxu0 0.0
    %1373 = vmatprep.subr.mxu0 0.0
    %1374 = vmatpush1.msra.mxu0 0.0
    %1375 = vmatprep.subr.mxu0 0.0
    %1376 = vmatpush1.msra.mxu0 0.0
    %1377 = vmatprep.subr.mxu0 0.0
    %1378 = vmatpush1.msra.mxu0 0.0
    %1379 = vmatprep.subr.mxu0 0.0
    %1380 = vmatpush1.msra.mxu0 0.0
    %1381 = vmatprep.subr.mxu0 0.0
    %1382 = vmatpush1.msra.mxu0 0.0
    %1383 = vmatprep.subr.mxu0 0.0
    %1384 = vmatpush1.msra.mxu0 0.0
    %1385 = vmatprep.subr.mxu0 0.0
    %1386 = vmatpush1.msra.mxu0 0.0
    %1387 = vmatprep.subr.mxu0 0.0
    %1388 = vmatpush1.msra.mxu0 0.0
    %1389 = vmatprep.subr.mxu0 0.0
    %1390 = vmatpush1.msra.mxu0 0.0
    %1391 = vmatprep.subr.mxu0 0.0
    %1392 = vmatpush1.msra.mxu0 0.0
    %1393 = vmatprep.subr.mxu0 0.0
    %1394 = vmatpush1.msra.mxu0 0.0
    %1395 = vmatprep.subr.mxu0 0.0
    %1396 = vmatpush1.msra.mxu0 0.0
    %1397 = vmatprep.subr.mxu0 0.0
    %1398 = vmatpush1.msra.mxu0 0.0
    %1399 = vmatprep.subr.mxu0 0.0
    %1400 = vmatpush1.msra.mxu0 0.0
    %1401 = vmatprep.subr.mxu0 0.0
    %1402 = vmatpush1.msra.mxu0 0.0
    %1403 = vmatprep.subr.mxu0 0.0
    %1404 = vmatpush1.msra.mxu0 0.0
    %1405 = vmatprep.subr.mxu0 0.0
    %1406 = vmatpush1.msra.mxu0 0.0
    %1407 = vmatprep.subr.mxu0 0.0
    %1408 = vmatpush1.msra.mxu0 0.0
    %1409 = vmatprep.mubr.f32.mxu0 0.0
    %1410 = vmatmul.mubr.f32.gmra.mrb[0].mxu0 %v1343
    %v1411 = vpop.f32.mrb[0].mxu0
    %v1412 = vadd.f32 0.0, %v1411
    %v1413 = vpop.f32.mrb[0].mxu0
    %1414 = vdwg.mxu0
    %v1415 = vadd.f32 %v36, %v1412
    %v1416 = vtanh.pop %v1415
    %v1417 = vsel %vm179, %v1416, 0.0
    %v1418 = vrot.slane %v1417, 4
    %v1419 = vadd.f32 %v1417, %v1418
    %v1420 = vrot.slane %v1419, 2
    %v1421 = vadd.f32 %v1419, %v1420
    %v1422 = vrot.slane %v1421, 1
    %v1423 = vadd.f32 %v1421, %v1422
    %v1424 = vrcp.pop 8.0
    %v1425 = vmul.f32 %v1423, %v1424
    %v1426 = vsub.f32 %v1416, %v1425
    %v1427 = vmul.f32 %v1426, %v1426
    %v1428 = vsel %vm179, %v1427, 0.0
    %v1429 = vrot.slane %v1428, 4
    %v1430 = vadd.f32 %v1428, %v1429
    %v1431 = vrot.slane %v1430, 2
    %v1432 = vadd.f32 %v1430, %v1431
    %v1433 = vrot.slane %v1432, 1
    %v1434 = vadd.f32 %v1432, %v1433
    %v1435 = vmul.f32 %v1434, %v1424
    %v1436 = vadd.f32 %v1435, 1e-05
    %v1437 = vrsqrt.pop %v1436
    %v1438 = vmul.f32 %v1426, %v1437
    %v1439 = vlaneseq
    %v1440 = vshrl.u32 %v1439, 7
    %v1441 = vsub.s32 2, %v1440
    %v1442 = vrot.slane %v32, %v1441
    %v1443 = vmul.f32 %v1438, %v1442
    %v1444 = vlaneseq
    %v1445 = vshrl.u32 %v1444, 7
    %v1446 = vsub.s32 3, %v1445
    %v1447 = vrot.slane %v32, %v1446
    %v1448 = vadd.f32 %v1443, %v1447
    %v1449 = vld [vmem:[%s3] sm:$0xff]
    %v1450 = vld [vmem:[%s3 + $0x8] sm:$0xff]
    %v1451 = vld [vmem:[%s3 + $0x10] sm:$0xff]
    %v1452 = vld [vmem:[%s3 + $0x18] sm:$0xff]
    %v1453 = vlaneseq
    %v1454 = vshrl.u32 %v1453, 7
    %v1455 = vsub.s32 4, %v1454
    %v1456 = vrot.slane %v32, %v1455
    %v1458 = vsel %vm179, %v1448, 0
    %1460 = vmatprep.subr.mxu0 0.0
    %1461 = vmatpush1.msra.mxu0 %v1449
    %1462 = vmatprep.subr.mxu0 0.0
    %1463 = vmatpush1.msra.mxu0 %v1450
    %1464 = vmatprep.subr.mxu0 0.0
    %1465 = vmatpush1.msra.mxu0 %v1451
    %1466 = vmatprep.subr.mxu0 0.0
    %1467 = vmatpush1.msra.mxu0 %v1452
    %1468 = vmatprep.subr.mxu0 0.0
    %1469 = vmatpush1.msra.mxu0 0.0
    %1470 = vmatprep.subr.mxu0 0.0
    %1471 = vmatpush1.msra.mxu0 0.0
    %1472 = vmatprep.subr.mxu0 0.0
    %1473 = vmatpush1.msra.mxu0 0.0
    %1474 = vmatprep.subr.mxu0 0.0
    %1475 = vmatpush1.msra.mxu0 0.0
    %1476 = vmatprep.subr.mxu0 0.0
    %1477 = vmatpush1.msra.mxu0 0.0
    %1478 = vmatprep.subr.mxu0 0.0
    %1479 = vmatpush1.msra.mxu0 0.0
    %1480 = vmatprep.subr.mxu0 0.0
    %1481 = vmatpush1.msra.mxu0 0.0
    %1482 = vmatprep.subr.mxu0 0.0
    %1483 = vmatpush1.msra.mxu0 0.0
    %1484 = vmatprep.subr.mxu0 0.0
    %1485 = vmatpush1.msra.mxu0 0.0
    %1486 = vmatprep.subr.mxu0 0.0
    %1487 = vmatpush1.msra.mxu0 0.0
    %1488 = vmatprep.subr.mxu0 0.0
    %1489 = vmatpush1.msra.mxu0 0.0
    %1490 = vmatprep.subr.mxu0 0.0
    %1491 = vmatpush1.msra.mxu0 0.0
    %1492 = vmatprep.subr.mxu0 0.0
    %1493 = vmatpush1.msra.mxu0 0.0
    %1494 = vmatprep.subr.mxu0 0.0
    %1495 = vmatpush1.msra.mxu0 0.0
    %1496 = vmatprep.subr.mxu0 0.0
    %1497 = vmatpush1.msra.mxu0 0.0
    %1498 = vmatprep.subr.mxu0 0.0
    %1499 = vmatpush1.msra.mxu0 0.0
    %1500 = vmatprep.subr.mxu0 0.0
    %1501 = vmatpush1.msra.mxu0 0.0
    %1502 = vmatprep.subr.mxu0 0.0
    %1503 = vmatpush1.msra.mxu0 0.0
    %1504 = vmatprep.subr.mxu0 0.0
    %1505 = vmatpush1.msra.mxu0 0.0
    %1506 = vmatprep.subr.mxu0 0.0
    %1507 = vmatpush1.msra.mxu0 0.0
    %1508 = vmatprep.subr.mxu0 0.0
    %1509 = vmatpush1.msra.mxu0 0.0
    %1510 = vmatprep.subr.mxu0 0.0
    %1511 = vmatpush1.msra.mxu0 0.0
    %1512 = vmatprep.subr.mxu0 0.0
    %1513 = vmatpush1.msra.mxu0 0.0
    %1514 = vmatprep.subr.mxu0 0.0
    %1515 = vmatpush1.msra.mxu0 0.0
    %1516 = vmatprep.subr.mxu0 0.0
    %1517 = vmatpush1.msra.mxu0 0.0
    %1518 = vmatprep.subr.mxu0 0.0
    %1519 = vmatpush1.msra.mxu0 0.0
    %1520 = vmatprep.subr.mxu0 0.0
    %1521 = vmatpush1.msra.mxu0 0.0
    %1522 = vmatprep.subr.mxu0 0.0
    %1523 = vmatpush1.msra.mxu0 0.0
    %1524 = vmatprep.mubr.f32.mxu0 0.0
    %1525 = vmatmul.mubr.f32.gmra.mrb[0].mxu0 %v1458
    %v1526 = vpop.f32.mrb[0].mxu0
    %v1527 = vadd.f32 %v1456, %v1526
    %v1528 = vpop.f32.mrb[0].mxu0
    %1529 = vdwg.mxu0
    %vm1530 = vcmask 80896
    %1531 = vst.msk [vmem:[#allocation2] sm:$0xff] %vm1530, %v1527
    // Predicated region
    $region18: #{simple_rnn_forward.1} parent=1 // pred_check
      _
    $region19: #{simple_rnn_forward.1} parent=1 // pred_check_branch
      %1533 = sbr.rel (0) target = $region21
    $region20: #{simple_rnn_forward.1} parent=1 // pred_region
      %s1535 = ssub.s32 128, 128
      %1536 = vsyncadd [#allocation3], %s1535
      %s1538 = sshll.u32 [#allocation2], 4
      %s1539 = int_to_ptr.vmem [resolvable:$true] %s1538
      %1541 = dma.vmem_to_hbm [thread:$0]  %s1539, 128, %s4, [#allocation3]
    $region21: #{simple_rnn_forward.1} parent=1 // pred_fallthru
      _
    // Predicated region
    $region22: #{simple_rnn_forward.1} parent=1 // pred_check
      _
    $region23: #{simple_rnn_forward.1} parent=1 // pred_check_branch
      %1543 = sbr.rel (0) target = $region25
    $region24: #{simple_rnn_forward.1} parent=1 // pred_region
      %1544 = dma.done [#allocation3], 128
    $region25: #{simple_rnn_forward.1} parent=1 // pred_fallthru
      _
    %1545 = vsyncpa [#allocation3], 1

</llo_original>
